<compile_context>
chip_gen: v6e
topology: v6e:2x2x1
jax: 0.10.0
libtpu: 0.0.40
codegen_flags: <defaults>
</compile_context>

<pallas_src>
import numpy as np
import jax
import jax.numpy as jnp
from jax.experimental import pallas as pl
from jax.experimental.pallas import tpu as pltpu

# ----------------------------- model sizes ---------------------------------
I_IN = 8                                  # input image side (8x8)
K_CONV = 2                                # conv RBS kernel size
I_POOL = 4                                # pooled image side (4x4)
ADD1, ADD2 = 0, 0                         # extra photonic modes (chosen 0)
M_MODES = I_POOL + I_POOL + ADD1 + ADD2   # 8 optical modes
D_IN = I_IN * I_IN                        # 64
D_POOL = I_POOL * I_POOL                  # 16
D_FOCK = M_MODES * (M_MODES + 1) // 2     # 36 (2 photons in 8 modes)
MODES_DETECTED = [0, 1]                   # 2 classes
N_CLASS = len(MODES_DETECTED)
D_FLAT = D_IN * D_IN                      # 4096 (flattened density matrix)
N_PAD = 128                               # lane-dense padded class dimension


# ----------------------------- Pallas kernel --------------------------------
def qcnn_kernel(x_ref, p_ref, out_ref):
    # x_ref: (TB, 4096)   p_ref: (4096, 128) f32   out_ref: (TB, 128) f32
    # One lane-dense MXU matmul with f32 accumulation.  The input is consumed
    # in its HBM dtype (f32 or bf16) -- no standalone convert pass over HBM.
    out_ref[...] = jnp.dot(x_ref[...], p_ref[...],
                           preferred_element_type=jnp.float32)


def _round_up(x, m):
    return ((x + m - 1) // m) * m


def _batch_tile_cap():
    # Per-generation batch-tile cap against default scoped-VMEM limits:
    #   v5e : 16 MiB scoped -> TB=256 f32 (2 x 4 MiB in + 2 MiB wts + out)
    #   v6e / v7x : 32 MiB  -> TB=512 f32 (2 x 8 MiB in + 2 MiB wts + out)
    try:
        kind = jax.devices()[0].device_kind.lower()
    except Exception:  # pragma: no cover - be conservative if query fails
        kind = ""
    return 512 if ("v6" in kind or "v7" in kind) else 256


def _weight_spec():
    # Constant-index weight slab: request a single pipeline buffer (it is
    # never re-fetched, so a second buffer would be pure VMEM waste).
    try:
        return pl.BlockSpec((D_FLAT, N_PAD), lambda b: (0, 0),
                            pipeline_mode=pl.Buffered(1))
    except TypeError:   # older BlockSpec signature -> default double buffer
        return pl.BlockSpec((D_FLAT, N_PAD), lambda b: (0, 0))


@jax.jit
def photonic_qcnn_forward(x, p_obs_pad):
    """x: (B, 64, 64) density matrices (f32 or bf16). p_obs_pad: (4096, 128) f32."""
    B = x.shape[0]
    x_flat = x.reshape(B, D_FLAT)            # no dtype cast (fused path)

    cap = _batch_tile_cap()
    TB = min(cap, _round_up(B, 16))          # 16-row (bf16-native) alignment
    Bp = _round_up(B, TB)                    # whole number of full tiles
    if Bp != B:
        # Fused under jit; at most TB-1 zero rows, never collapses tile size.
        x_flat = jnp.pad(x_flat, ((0, Bp - B), (0, 0)))

    out = pl.pallas_call(
        qcnn_kernel,
        out_shape=jax.ShapeDtypeStruct((Bp, N_PAD), jnp.float32),
        grid_spec=pltpu.PrefetchScalarGridSpec(
            num_scalar_prefetch=0,
            grid=(Bp // TB,),
            in_specs=[
                pl.BlockSpec((TB, D_FLAT), lambda b: (b, 0)),   # rho batch tile
                _weight_spec(),                                 # observables
            ],
            out_specs=pl.BlockSpec((TB, N_PAD), lambda b: (b, 0)),
        ),
        compiler_params=pltpu.CompilerParams(
            # batch axis is parallel -> v7x shards grid steps over both TCs
            dimension_semantics=("parallel",)),
    )(x_flat, p_obs_pad)
    return out[:B, :N_CLASS]


# -------------------- deterministic parameter construction ------------------
def _rbs(theta):
    c, s = np.cos(theta), np.sin(theta)
    return np.array([[c, s], [-s, c]], dtype=np.float64)


def conv_unitary(I, thetas_row, thetas_col):
    """Conv_RBS_density_I2: Uc = W_row (x) W_col, W block-diag of 2x2 RBS."""
    def block(thetas):
        W = np.zeros((I, I))
        for b, th in enumerate(thetas):
            W[2 * b:2 * b + 2, 2 * b:2 * b + 2] = _rbs(th)
        return W
    return np.kron(block(thetas_row), block(thetas_col))        # (I*I, I*I)


def pooling_matrices(I, O):
    """Pooling_2D_density_HW: selection matrices Mk (partial trace of offset)."""
    s = I // O
    M = np.zeros((s * s, O * O, I * I))
    for kr in range(s):
        for kc in range(s):
            k = kr * s + kc
            for pr in range(O):
                for pc in range(O):
                    M[k, pr * O + pc, (s * pr + kr) * I + (s * pc + kc)] = 1.0
    return M


def fock_basis(m):
    return [(i, j) for i in range(m) for j in range(i, m)]      # 2-photon states


def image_to_fock_embedding(O, basis):
    """Basis_Change_Image_to_larger_Fock_density: image (r,c) -> |1_r, 1_{O+c}>."""
    idx = {st: n for n, st in enumerate(basis)}
    E = np.zeros((len(basis), O * O))
    for r in range(O):
        for c in range(O):
            E[idx[(r, O + c)], r * O + c] = 1.0
    return E


def pqnn_gate_list(m):
    """PQNN pyramid of nearest-neighbour beam splitters (brick-wall layers)."""
    gates = []
    for layer in range(m - 1):
        for i in range(layer % 2, m - 1, 2):
            gates.append((i, i + 1))
    return gates


def dense_fock_unitary(m, gates, thetas, basis):
    """VQC_Fock_BS_density: lift product of 2-mode BS to 2-photon Fock space."""
    u = np.eye(m)
    for (p, q), th in zip(gates, thetas):
        g = np.eye(m)
        g[np.ix_([p, q], [p, q])] = _rbs(th)
        u = g @ u
    # symmetric-subspace isometry V : Fock(2, m) -> C^m (x) C^m
    V = np.zeros((m * m, len(basis)))
    for n, (a, b) in enumerate(basis):
        if a == b:
            V[a * m + b, n] = 1.0
        else:
            V[a * m + b, n] = V[b * m + a, n] = 1.0 / np.sqrt(2.0)
    return V.T @ np.kron(u, u) @ V                               # (36, 36)


def detection_weights(basis, modes):
    """Measure_Photon_detection: indicator of >=1 photon in each detected mode."""
    W = np.zeros((len(basis), len(modes)))
    for n, (a, b) in enumerate(basis):
        for i, mo in enumerate(modes):
            if mo == a or mo == b:
                W[n, i] = 1.0
    return W                                                     # (36, 2)


def build_observables(u_conv, m_pool, a_fused, w_sel_t):
    """Fold the full linear pipeline into per-class 64x64 observables P_c,
    flattened (row-major, matching rho.reshape(-1)) and zero-padded to 128
    classes so the kernel's output store is lane-dense."""
    P = np.zeros((D_FLAT, N_PAD), dtype=np.float64)
    for c in range(N_CLASS):
        Oc = a_fused.T @ (w_sel_t[:, c:c + 1] * a_fused)         # (16,16)
        S = np.zeros((D_IN, D_IN))
        for k in range(m_pool.shape[0]):
            S = S + m_pool[k].T @ Oc @ m_pool[k]                 # (64,64)
        Pc = u_conv.T @ S @ u_conv                               # (64,64)
        P[:, c] = Pc.reshape(-1)
    return P


# ------------------------------ reference -----------------------------------
def reference_forward(x, u_conv, m_pool, a_fused, w_sel_t):
    """Layer-by-layer f32 reference (no observable folding)."""
    rho1 = jnp.einsum('ij,bjk,lk->bil', u_conv, x, u_conv)
    rho2 = jnp.einsum('kij,bjl,kml->bim', m_pool, rho1, m_pool)
    rho4 = jnp.einsum('ij,bjk,lk->bil', a_fused, rho2, a_fused)
    diag = jnp.diagonal(rho4, axis1=1, axis2=2)
    return diag @ w_sel_t


# --------------------------------- main --------------------------------------
if __name__ == "__main__":
    B = 18                                        # small, non-multiple of 16
    key = jax.random.PRNGKey(0)
    k_cr, k_cc, k_d, k_x = jax.random.split(key, 4)

    # deterministic parameters (angles)
    th_row = np.asarray(jax.random.uniform(k_cr, (I_IN // K_CONV,),
                                           minval=0.0, maxval=np.pi))
    th_col = np.asarray(jax.random.uniform(k_cc, (I_IN // K_CONV,),
                                           minval=0.0, maxval=np.pi))
    gates = pqnn_gate_list(M_MODES)
    th_dense = np.asarray(jax.random.uniform(k_d, (len(gates),),
                                             minval=0.0, maxval=np.pi))

    basis = fock_basis(M_MODES)
    u_conv_np = conv_unitary(I_IN, th_row, th_col)                    # (64,64)
    m_pool_np = pooling_matrices(I_IN, I_POOL)                        # (4,16,64)
    E_np = image_to_fock_embedding(I_POOL, basis)                     # (36,16)
    U_fock_np = dense_fock_unitary(M_MODES, gates, th_dense, basis)   # (36,36)
    a_fused_np = U_fock_np @ E_np                                     # (36,16)
    w_sel_t_np = detection_weights(basis, MODES_DETECTED)             # (36,2)

    # host-folded observables -> single kernel weight slab (kept in f32:
    # only 2 MiB, loaded once, halves the quantization-error contribution)
    p_obs_np = build_observables(u_conv_np, m_pool_np, a_fused_np, w_sel_t_np)
    p_obs_pad = jnp.asarray(p_obs_np, jnp.float32)                    # (4096,128)

    # input: batch of pure-state density matrices of an 8x8 "image"
    v = jax.random.uniform(k_x, (B, D_IN), dtype=jnp.float32)
    v = v / jnp.linalg.norm(v, axis=-1, keepdims=True)
    x = jnp.einsum('bi,bj->bij', v, v)                                # (B,64,64)

    out = photonic_qcnn_forward(x, p_obs_pad)
    out = jax.block_until_ready(out)

    ref = np.asarray(reference_forward(
        x,
        jnp.asarray(u_conv_np, jnp.float32),
        jnp.asarray(m_pool_np, jnp.float32),
        jnp.asarray(a_fused_np, jnp.float32),
        jnp.asarray(w_sel_t_np, jnp.float32)))

    np.testing.assert_allclose(np.asarray(out), ref, atol=1e-2, rtol=1e-2)
    assert out.shape == (B, N_CLASS) and np.all(np.isfinite(np.asarray(out)))
    print("KERNEL_OK")
</pallas_src>

<mosaic_0001>
module attributes {stable_mosaic.version = 11 : i64} {
  func.func @qcnn_kernel(%arg0: i32, %arg1: memref<32x4096xf32, #tpu.memory_space<vmem>>, %arg2: memref<4096x128xf32, #tpu.memory_space<vmem>>, %arg3: memref<32x128xf32, #tpu.memory_space<vmem>>) attributes {dimension_semantics = [#tpu.dimension_semantics<parallel>], iteration_bounds = array<i64: 1>, scalar_prefetch = 0 : i64, scratch_operands = 0 : i64, tpu.core_type = #tpu.core_type<tc>, window_params = [{transform_indices = @transform_0, window_bounds = array<i64: 32, 4096>}, {pipeline_mode = #tpu.pipeline_mode<synchronous>, transform_indices = @transform_1, window_bounds = array<i64: 4096, 128>}, {transform_indices = @transform_2, window_bounds = array<i64: 32, 128>}]} {
    %c0 = arith.constant 0 : index
    %c0_0 = arith.constant 0 : index
    %0 = vector.load %arg1[%c0, %c0_0] : memref<32x4096xf32, #tpu.memory_space<vmem>>, vector<32x4096xf32>
    %c0_1 = arith.constant 0 : index
    %c0_2 = arith.constant 0 : index
    %1 = vector.load %arg2[%c0_1, %c0_2] : memref<4096x128xf32, #tpu.memory_space<vmem>>, vector<4096x128xf32>
    %cst = arith.constant dense<0.000000e+00> : vector<32x128xf32>
    %2 = tpu.matmul %0, %1, %cst {dimension_numbers = #tpu.dot_dimension_numbers<[1], [0], [0], [1], [0, 0, 1, 1], [], []>} : vector<32x4096xf32>, vector<4096x128xf32>, vector<32x128xf32> -> vector<32x128xf32>
    %c0_3 = arith.constant 0 : index
    %c0_4 = arith.constant 0 : index
    %3 = vector.load %arg3[%c0_3, %c0_4] : memref<32x128xf32, #tpu.memory_space<vmem>>, vector<32x128xf32>
    tpu.vector_store %arg3[%c0_3, %c0_4], %2 {strides = array<i32>} : memref<32x128xf32, #tpu.memory_space<vmem>>, vector<32x128xf32>,
    return
  }
  func.func @transform_0(%arg0: i32) -> (i32, i32) {
    %c0_i32 = arith.constant 0 : i32
    %c0_i32_0 = arith.constant 0 : i32
    return %arg0, %c0_i32 : i32, i32
  }
  func.func @transform_1(%arg0: i32) -> (i32, i32) {
    %c0_i32 = arith.constant 0 : i32
    %c0_i32_0 = arith.constant 0 : i32
    %c0_i32_1 = arith.constant 0 : i32
    return %c0_i32, %c0_i32_0 : i32, i32
  }
  func.func @transform_2(%arg0: i32) -> (i32, i32) {
    %c0_i32 = arith.constant 0 : i32
    %c0_i32_0 = arith.constant 0 : i32
    return %arg0, %c0_i32 : i32, i32
  }
}

</mosaic_0001>

<llo_original>
// kernel: photonic_qcnn_forward.1
$region0: #{photonic_qcnn_forward.1}
  #allocation0 [shape = 'u32[]', space=smem, size = 0x4, offset = 0x4, fixed_abs, tag = 'smem constant byte address 0x4 - core index']
  #allocation1 [shape = 'u32[144,128]{1,0:T(1,128)}', space=vmem, size = 0x12000, scoped, tag = 'internal scratch']
  %s0 = inlined_call_operand.vmem [shape: f32[32,4096], index: 0, kind: input, shape index: {}]
  %s1 = inlined_call_operand.hbm [shape: f32[4096,128], index: 1, kind: input, shape index: {}]
  %s2 = inlined_call_operand.vmem [shape: f32[32,128], index: 2, kind: output, shape index: {}]
  %s3 = sld [smem:[#allocation0]]
  $region22: #{photonic_qcnn_forward.1} parent=0
    _
  %s5 = ssub.s32 1, %s3
  %s6 = scalar_select 0, %s5, %s3
  $region1: #{photonic_qcnn_forward.1} parent=0
    #allocation2 [shape = 'u8[2097152]{0}', space=vmem, size = 0x200000, scoped, tag = 'input window, operand 1, single buffered']
    #allocation3 [shape = 's32[1]{0}', space=sflag, size = 0x4, scoped, tag = 'scoped memory for photonic_qcnn_forward.1']
    %7 = vsyncpa [#allocation3], 0
    // Predicated region
    $region2: #{photonic_qcnn_forward.1} parent=1 // pred_check
      _
    $region3: #{photonic_qcnn_forward.1} parent=1 // pred_check_branch
      %9 = sbr.rel (0) target = $region5
    $region4: #{photonic_qcnn_forward.1} parent=1 // pred_region
      _
    $region5: #{photonic_qcnn_forward.1} parent=1 // pred_fallthru
      _
    // Predicated region
    $region6: #{photonic_qcnn_forward.1} parent=1 // pred_check
      _
    $region7: #{photonic_qcnn_forward.1} parent=1 // pred_check_branch
      %11 = sbr.rel (0) target = $region9
    $region8: #{photonic_qcnn_forward.1} parent=1 // pred_region
      %s13 = ssub.s32 65536, 65536
      %14 = vsyncadd [#allocation3], %s13
      %s15 = sshll.u32 [#allocation2], 4
      %s16 = int_to_ptr.vmem [resolvable:$true] %s15
      %21 = dma.hbm_to_vmem [thread:$0]  %s1, 65536, %s16, [#allocation3], 128, 128, 8
    $region9: #{photonic_qcnn_forward.1} parent=1 // pred_fallthru
      _
    // Predicated region
    $region10: #{photonic_qcnn_forward.1} parent=1 // pred_check
      _
    $region11: #{photonic_qcnn_forward.1} parent=1 // pred_check_branch
      %23 = sbr.rel (0) target = $region13
    $region12: #{photonic_qcnn_forward.1} parent=1 // pred_region
      %24 = dma.done [#allocation3], 65536
    $region13: #{photonic_qcnn_forward.1} parent=1 // pred_fallthru
      _
    %v25 = vld [vmem:[%s0] sm:$0xff]
    %v26 = vld [vmem:[%s0 + $0x8] sm:$0xff]
    %v27 = vld [vmem:[%s0 + $0x10] sm:$0xff]
    %v28 = vld [vmem:[%s0 + $0x18] sm:$0xff]
    %v29 = vld [vmem:[%s0 + $0x20] sm:$0xff]
    %v30 = vld [vmem:[%s0 + $0x28] sm:$0xff]
    %v31 = vld [vmem:[%s0 + $0x30] sm:$0xff]
    %v32 = vld [vmem:[%s0 + $0x38] sm:$0xff]
    %v33 = vld [vmem:[%s0 + $0x40] sm:$0xff]
    %v34 = vld [vmem:[%s0 + $0x48] sm:$0xff]
    %v35 = vld [vmem:[%s0 + $0x50] sm:$0xff]
    %v36 = vld [vmem:[%s0 + $0x58] sm:$0xff]
    %v37 = vld [vmem:[%s0 + $0x60] sm:$0xff]
    %v38 = vld [vmem:[%s0 + $0x68] sm:$0xff]
    %v39 = vld [vmem:[%s0 + $0x70] sm:$0xff]
    %v40 = vld [vmem:[%s0 + $0x78] sm:$0xff]
    %v41 = vld [vmem:[%s0 + $0x80] sm:$0xff]
    %v42 = vld [vmem:[%s0 + $0x88] sm:$0xff]
    %v43 = vld [vmem:[%s0 + $0x90] sm:$0xff]
    %v44 = vld [vmem:[%s0 + $0x98] sm:$0xff]
    %v45 = vld [vmem:[%s0 + $0xa0] sm:$0xff]
    %v46 = vld [vmem:[%s0 + $0xa8] sm:$0xff]
    %v47 = vld [vmem:[%s0 + $0xb0] sm:$0xff]
    %v48 = vld [vmem:[%s0 + $0xb8] sm:$0xff]
    %v49 = vld [vmem:[%s0 + $0xc0] sm:$0xff]
    %v50 = vld [vmem:[%s0 + $0xc8] sm:$0xff]
    %v51 = vld [vmem:[%s0 + $0xd0] sm:$0xff]
    %v52 = vld [vmem:[%s0 + $0xd8] sm:$0xff]
    %v53 = vld [vmem:[%s0 + $0xe0] sm:$0xff]
    %v54 = vld [vmem:[%s0 + $0xe8] sm:$0xff]
    %v55 = vld [vmem:[%s0 + $0xf0] sm:$0xff]
    %v56 = vld [vmem:[%s0 + $0xf8] sm:$0xff]
    %v57 = vld [vmem:[%s0 + $0x100] sm:$0xff]
    %v58 = vld [vmem:[%s0 + $0x108] sm:$0xff]
    %v59 = vld [vmem:[%s0 + $0x110] sm:$0xff]
    %v60 = vld [vmem:[%s0 + $0x118] sm:$0xff]
    %v61 = vld [vmem:[%s0 + $0x120] sm:$0xff]
    %v62 = vld [vmem:[%s0 + $0x128] sm:$0xff]
    %v63 = vld [vmem:[%s0 + $0x130] sm:$0xff]
    %v64 = vld [vmem:[%s0 + $0x138] sm:$0xff]
    %v65 = vld [vmem:[%s0 + $0x140] sm:$0xff]
    %v66 = vld [vmem:[%s0 + $0x148] sm:$0xff]
    %v67 = vld [vmem:[%s0 + $0x150] sm:$0xff]
    %v68 = vld [vmem:[%s0 + $0x158] sm:$0xff]
    %v69 = vld [vmem:[%s0 + $0x160] sm:$0xff]
    %v70 = vld [vmem:[%s0 + $0x168] sm:$0xff]
    %v71 = vld [vmem:[%s0 + $0x170] sm:$0xff]
    %v72 = vld [vmem:[%s0 + $0x178] sm:$0xff]
    %v73 = vld [vmem:[%s0 + $0x180] sm:$0xff]
    %v74 = vld [vmem:[%s0 + $0x188] sm:$0xff]
    %v75 = vld [vmem:[%s0 + $0x190] sm:$0xff]
    %v76 = vld [vmem:[%s0 + $0x198] sm:$0xff]
    %v77 = vld [vmem:[%s0 + $0x1a0] sm:$0xff]
    %v78 = vld [vmem:[%s0 + $0x1a8] sm:$0xff]
    %v79 = vld [vmem:[%s0 + $0x1b0] sm:$0xff]
    %v80 = vld [vmem:[%s0 + $0x1b8] sm:$0xff]
    %v81 = vld [vmem:[%s0 + $0x1c0] sm:$0xff]
    %v82 = vld [vmem:[%s0 + $0x1c8] sm:$0xff]
    %v83 = vld [vmem:[%s0 + $0x1d0] sm:$0xff]
    %v84 = vld [vmem:[%s0 + $0x1d8] sm:$0xff]
    %v85 = vld [vmem:[%s0 + $0x1e0] sm:$0xff]
    %v86 = vld [vmem:[%s0 + $0x1e8] sm:$0xff]
    %v87 = vld [vmem:[%s0 + $0x1f0] sm:$0xff]
    %v88 = vld [vmem:[%s0 + $0x1f8] sm:$0xff]
    %v89 = vld [vmem:[%s0 + $0x200] sm:$0xff]
    %v90 = vld [vmem:[%s0 + $0x208] sm:$0xff]
    %v91 = vld [vmem:[%s0 + $0x210] sm:$0xff]
    %v92 = vld [vmem:[%s0 + $0x218] sm:$0xff]
    %v93 = vld [vmem:[%s0 + $0x220] sm:$0xff]
    %v94 = vld [vmem:[%s0 + $0x228] sm:$0xff]
    %v95 = vld [vmem:[%s0 + $0x230] sm:$0xff]
    %v96 = vld [vmem:[%s0 + $0x238] sm:$0xff]
    %v97 = vld [vmem:[%s0 + $0x240] sm:$0xff]
    %v98 = vld [vmem:[%s0 + $0x248] sm:$0xff]
    %v99 = vld [vmem:[%s0 + $0x250] sm:$0xff]
    %v100 = vld [vmem:[%s0 + $0x258] sm:$0xff]
    %v101 = vld [vmem:[%s0 + $0x260] sm:$0xff]
    %v102 = vld [vmem:[%s0 + $0x268] sm:$0xff]
    %v103 = vld [vmem:[%s0 + $0x270] sm:$0xff]
    %v104 = vld [vmem:[%s0 + $0x278] sm:$0xff]
    %v105 = vld [vmem:[%s0 + $0x280] sm:$0xff]
    %v106 = vld [vmem:[%s0 + $0x288] sm:$0xff]
    %v107 = vld [vmem:[%s0 + $0x290] sm:$0xff]
    %v108 = vld [vmem:[%s0 + $0x298] sm:$0xff]
    %v109 = vld [vmem:[%s0 + $0x2a0] sm:$0xff]
    %v110 = vld [vmem:[%s0 + $0x2a8] sm:$0xff]
    %v111 = vld [vmem:[%s0 + $0x2b0] sm:$0xff]
    %v112 = vld [vmem:[%s0 + $0x2b8] sm:$0xff]
    %v113 = vld [vmem:[%s0 + $0x2c0] sm:$0xff]
    %v114 = vld [vmem:[%s0 + $0x2c8] sm:$0xff]
    %v115 = vld [vmem:[%s0 + $0x2d0] sm:$0xff]
    %v116 = vld [vmem:[%s0 + $0x2d8] sm:$0xff]
    %v117 = vld [vmem:[%s0 + $0x2e0] sm:$0xff]
    %v118 = vld [vmem:[%s0 + $0x2e8] sm:$0xff]
    %v119 = vld [vmem:[%s0 + $0x2f0] sm:$0xff]
    %v120 = vld [vmem:[%s0 + $0x2f8] sm:$0xff]
    %v121 = vld [vmem:[%s0 + $0x300] sm:$0xff]
    %v122 = vld [vmem:[%s0 + $0x308] sm:$0xff]
    %v123 = vld [vmem:[%s0 + $0x310] sm:$0xff]
    %v124 = vld [vmem:[%s0 + $0x318] sm:$0xff]
    %v125 = vld [vmem:[%s0 + $0x320] sm:$0xff]
    %v126 = vld [vmem:[%s0 + $0x328] sm:$0xff]
    %v127 = vld [vmem:[%s0 + $0x330] sm:$0xff]
    %v128 = vld [vmem:[%s0 + $0x338] sm:$0xff]
    %v129 = vld [vmem:[%s0 + $0x340] sm:$0xff]
    %v130 = vld [vmem:[%s0 + $0x348] sm:$0xff]
    %v131 = vld [vmem:[%s0 + $0x350] sm:$0xff]
    %v132 = vld [vmem:[%s0 + $0x358] sm:$0xff]
    %v133 = vld [vmem:[%s0 + $0x360] sm:$0xff]
    %v134 = vld [vmem:[%s0 + $0x368] sm:$0xff]
    %v135 = vld [vmem:[%s0 + $0x370] sm:$0xff]
    %v136 = vld [vmem:[%s0 + $0x378] sm:$0xff]
    %v137 = vld [vmem:[%s0 + $0x380] sm:$0xff]
    %v138 = vld [vmem:[%s0 + $0x388] sm:$0xff]
    %v139 = vld [vmem:[%s0 + $0x390] sm:$0xff]
    %v140 = vld [vmem:[%s0 + $0x398] sm:$0xff]
    %v141 = vld [vmem:[%s0 + $0x3a0] sm:$0xff]
    %v142 = vld [vmem:[%s0 + $0x3a8] sm:$0xff]
    %v143 = vld [vmem:[%s0 + $0x3b0] sm:$0xff]
    %v144 = vld [vmem:[%s0 + $0x3b8] sm:$0xff]
    %v145 = vld [vmem:[%s0 + $0x3c0] sm:$0xff]
    %v146 = vld [vmem:[%s0 + $0x3c8] sm:$0xff]
    %v147 = vld [vmem:[%s0 + $0x3d0] sm:$0xff]
    %v148 = vld [vmem:[%s0 + $0x3d8] sm:$0xff]
    %v149 = vld [vmem:[%s0 + $0x3e0] sm:$0xff]
    %v150 = vld [vmem:[%s0 + $0x3e8] sm:$0xff]
    %v151 = vld [vmem:[%s0 + $0x3f0] sm:$0xff]
    %v152 = vld [vmem:[%s0 + $0x3f8] sm:$0xff]
    %v153 = vld [vmem:[#allocation2] sm:$0xff]
    %v154 = vld [vmem:[#allocation2 + $0x8] sm:$0xff]
    %v155 = vld [vmem:[#allocation2 + $0x10] sm:$0xff]
    %v156 = vld [vmem:[#allocation2 + $0x18] sm:$0xff]
    %v157 = vld [vmem:[#allocation2 + $0x20] sm:$0xff]
    %v158 = vld [vmem:[#allocation2 + $0x28] sm:$0xff]
    %v159 = vld [vmem:[#allocation2 + $0x30] sm:$0xff]
    %v160 = vld [vmem:[#allocation2 + $0x38] sm:$0xff]
    %v161 = vld [vmem:[#allocation2 + $0x40] sm:$0xff]
    %v162 = vld [vmem:[#allocation2 + $0x48] sm:$0xff]
    %v163 = vld [vmem:[#allocation2 + $0x50] sm:$0xff]
    %v164 = vld [vmem:[#allocation2 + $0x58] sm:$0xff]
    %v165 = vld [vmem:[#allocation2 + $0x60] sm:$0xff]
    %v166 = vld [vmem:[#allocation2 + $0x68] sm:$0xff]
    %v167 = vld [vmem:[#allocation2 + $0x70] sm:$0xff]
    %v168 = vld [vmem:[#allocation2 + $0x78] sm:$0xff]
    %v169 = vld [vmem:[#allocation2 + $0x80] sm:$0xff]
    %v170 = vld [vmem:[#allocation2 + $0x88] sm:$0xff]
    %v171 = vld [vmem:[#allocation2 + $0x90] sm:$0xff]
    %v172 = vld [vmem:[#allocation2 + $0x98] sm:$0xff]
    %v173 = vld [vmem:[#allocation2 + $0xa0] sm:$0xff]
    %v174 = vld [vmem:[#allocation2 + $0xa8] sm:$0xff]
    %v175 = vld [vmem:[#allocation2 + $0xb0] sm:$0xff]
    %v176 = vld [vmem:[#allocation2 + $0xb8] sm:$0xff]
    %v177 = vld [vmem:[#allocation2 + $0xc0] sm:$0xff]
    %v178 = vld [vmem:[#allocation2 + $0xc8] sm:$0xff]
    %v179 = vld [vmem:[#allocation2 + $0xd0] sm:$0xff]
    %v180 = vld [vmem:[#allocation2 + $0xd8] sm:$0xff]
    %v181 = vld [vmem:[#allocation2 + $0xe0] sm:$0xff]
    %v182 = vld [vmem:[#allocation2 + $0xe8] sm:$0xff]
    %v183 = vld [vmem:[#allocation2 + $0xf0] sm:$0xff]
    %v184 = vld [vmem:[#allocation2 + $0xf8] sm:$0xff]
    %v185 = vld [vmem:[#allocation2 + $0x100] sm:$0xff]
    %v186 = vld [vmem:[#allocation2 + $0x108] sm:$0xff]
    %v187 = vld [vmem:[#allocation2 + $0x110] sm:$0xff]
    %v188 = vld [vmem:[#allocation2 + $0x118] sm:$0xff]
    %v189 = vld [vmem:[#allocation2 + $0x120] sm:$0xff]
    %v190 = vld [vmem:[#allocation2 + $0x128] sm:$0xff]
    %v191 = vld [vmem:[#allocation2 + $0x130] sm:$0xff]
    %v192 = vld [vmem:[#allocation2 + $0x138] sm:$0xff]
    %v193 = vld [vmem:[#allocation2 + $0x140] sm:$0xff]
    %v194 = vld [vmem:[#allocation2 + $0x148] sm:$0xff]
    %v195 = vld [vmem:[#allocation2 + $0x150] sm:$0xff]
    %v196 = vld [vmem:[#allocation2 + $0x158] sm:$0xff]
    %v197 = vld [vmem:[#allocation2 + $0x160] sm:$0xff]
    %v198 = vld [vmem:[#allocation2 + $0x168] sm:$0xff]
    %v199 = vld [vmem:[#allocation2 + $0x170] sm:$0xff]
    %v200 = vld [vmem:[#allocation2 + $0x178] sm:$0xff]
    %v201 = vld [vmem:[#allocation2 + $0x180] sm:$0xff]
    %v202 = vld [vmem:[#allocation2 + $0x188] sm:$0xff]
    %v203 = vld [vmem:[#allocation2 + $0x190] sm:$0xff]
    %v204 = vld [vmem:[#allocation2 + $0x198] sm:$0xff]
    %v205 = vld [vmem:[#allocation2 + $0x1a0] sm:$0xff]
    %v206 = vld [vmem:[#allocation2 + $0x1a8] sm:$0xff]
    %v207 = vld [vmem:[#allocation2 + $0x1b0] sm:$0xff]
    %v208 = vld [vmem:[#allocation2 + $0x1b8] sm:$0xff]
    %v209 = vld [vmem:[#allocation2 + $0x1c0] sm:$0xff]
    %v210 = vld [vmem:[#allocation2 + $0x1c8] sm:$0xff]
    %v211 = vld [vmem:[#allocation2 + $0x1d0] sm:$0xff]
    %v212 = vld [vmem:[#allocation2 + $0x1d8] sm:$0xff]
    %v213 = vld [vmem:[#allocation2 + $0x1e0] sm:$0xff]
    %v214 = vld [vmem:[#allocation2 + $0x1e8] sm:$0xff]
    %v215 = vld [vmem:[#allocation2 + $0x1f0] sm:$0xff]
    %v216 = vld [vmem:[#allocation2 + $0x1f8] sm:$0xff]
    %v217 = vld [vmem:[#allocation2 + $0x200] sm:$0xff]
    %v218 = vld [vmem:[#allocation2 + $0x208] sm:$0xff]
    %v219 = vld [vmem:[#allocation2 + $0x210] sm:$0xff]
    %v220 = vld [vmem:[#allocation2 + $0x218] sm:$0xff]
    %v221 = vld [vmem:[#allocation2 + $0x220] sm:$0xff]
    %v222 = vld [vmem:[#allocation2 + $0x228] sm:$0xff]
    %v223 = vld [vmem:[#allocation2 + $0x230] sm:$0xff]
    %v224 = vld [vmem:[#allocation2 + $0x238] sm:$0xff]
    %v225 = vld [vmem:[#allocation2 + $0x240] sm:$0xff]
    %v226 = vld [vmem:[#allocation2 + $0x248] sm:$0xff]
    %v227 = vld [vmem:[#allocation2 + $0x250] sm:$0xff]
    %v228 = vld [vmem:[#allocation2 + $0x258] sm:$0xff]
    %v229 = vld [vmem:[#allocation2 + $0x260] sm:$0xff]
    %v230 = vld [vmem:[#allocation2 + $0x268] sm:$0xff]
    %v231 = vld [vmem:[#allocation2 + $0x270] sm:$0xff]
    %v232 = vld [vmem:[#allocation2 + $0x278] sm:$0xff]
    %v233 = vld [vmem:[#allocation2 + $0x280] sm:$0xff]
    %v234 = vld [vmem:[#allocation2 + $0x288] sm:$0xff]
    %v235 = vld [vmem:[#allocation2 + $0x290] sm:$0xff]
    %v236 = vld [vmem:[#allocation2 + $0x298] sm:$0xff]
    %v237 = vld [vmem:[#allocation2 + $0x2a0] sm:$0xff]
    %v238 = vld [vmem:[#allocation2 + $0x2a8] sm:$0xff]
    %v239 = vld [vmem:[#allocation2 + $0x2b0] sm:$0xff]
    %v240 = vld [vmem:[#allocation2 + $0x2b8] sm:$0xff]
    %v241 = vld [vmem:[#allocation2 + $0x2c0] sm:$0xff]
    %v242 = vld [vmem:[#allocation2 + $0x2c8] sm:$0xff]
    %v243 = vld [vmem:[#allocation2 + $0x2d0] sm:$0xff]
    %v244 = vld [vmem:[#allocation2 + $0x2d8] sm:$0xff]
    %v245 = vld [vmem:[#allocation2 + $0x2e0] sm:$0xff]
    %v246 = vld [vmem:[#allocation2 + $0x2e8] sm:$0xff]
    %v247 = vld [vmem:[#allocation2 + $0x2f0] sm:$0xff]
    %v248 = vld [vmem:[#allocation2 + $0x2f8] sm:$0xff]
    %v249 = vld [vmem:[#allocation2 + $0x300] sm:$0xff]
    %v250 = vld [vmem:[#allocation2 + $0x308] sm:$0xff]
    %v251 = vld [vmem:[#allocation2 + $0x310] sm:$0xff]
    %v252 = vld [vmem:[#allocation2 + $0x318] sm:$0xff]
    %v253 = vld [vmem:[#allocation2 + $0x320] sm:$0xff]
    %v254 = vld [vmem:[#allocation2 + $0x328] sm:$0xff]
    %v255 = vld [vmem:[#allocation2 + $0x330] sm:$0xff]
    %v256 = vld [vmem:[#allocation2 + $0x338] sm:$0xff]
    %v257 = vld [vmem:[#allocation2 + $0x340] sm:$0xff]
    %v258 = vld [vmem:[#allocation2 + $0x348] sm:$0xff]
    %v259 = vld [vmem:[#allocation2 + $0x350] sm:$0xff]
    %v260 = vld [vmem:[#allocation2 + $0x358] sm:$0xff]
    %v261 = vld [vmem:[#allocation2 + $0x360] sm:$0xff]
    %v262 = vld [vmem:[#allocation2 + $0x368] sm:$0xff]
    %v263 = vld [vmem:[#allocation2 + $0x370] sm:$0xff]
    %v264 = vld [vmem:[#allocation2 + $0x378] sm:$0xff]
    %v265 = vld [vmem:[#allocation2 + $0x380] sm:$0xff]
    %v266 = vld [vmem:[#allocation2 + $0x388] sm:$0xff]
    %v267 = vld [vmem:[#allocation2 + $0x390] sm:$0xff]
    %v268 = vld [vmem:[#allocation2 + $0x398] sm:$0xff]
    %v269 = vld [vmem:[#allocation2 + $0x3a0] sm:$0xff]
    %v270 = vld [vmem:[#allocation2 + $0x3a8] sm:$0xff]
    %v271 = vld [vmem:[#allocation2 + $0x3b0] sm:$0xff]
    %v272 = vld [vmem:[#allocation2 + $0x3b8] sm:$0xff]
    %v273 = vld [vmem:[#allocation2 + $0x3c0] sm:$0xff]
    %v274 = vld [vmem:[#allocation2 + $0x3c8] sm:$0xff]
    %v275 = vld [vmem:[#allocation2 + $0x3d0] sm:$0xff]
    %v276 = vld [vmem:[#allocation2 + $0x3d8] sm:$0xff]
    %v277 = vld [vmem:[#allocation2 + $0x3e0] sm:$0xff]
    %v278 = vld [vmem:[#allocation2 + $0x3e8] sm:$0xff]
    %v279 = vld [vmem:[#allocation2 + $0x3f0] sm:$0xff]
    %v280 = vld [vmem:[#allocation2 + $0x3f8] sm:$0xff]
    %v281 = vld [vmem:[#allocation2 + $0x400] sm:$0xff]
    %v282 = vld [vmem:[#allocation2 + $0x408] sm:$0xff]
    %v283 = vld [vmem:[#allocation2 + $0x410] sm:$0xff]
    %v284 = vld [vmem:[#allocation2 + $0x418] sm:$0xff]
    %v285 = vld [vmem:[#allocation2 + $0x420] sm:$0xff]
    %v286 = vld [vmem:[#allocation2 + $0x428] sm:$0xff]
    %v287 = vld [vmem:[#allocation2 + $0x430] sm:$0xff]
    %v288 = vld [vmem:[#allocation2 + $0x438] sm:$0xff]
    %v289 = vld [vmem:[#allocation2 + $0x440] sm:$0xff]
    %v290 = vld [vmem:[#allocation2 + $0x448] sm:$0xff]
    %v291 = vld [vmem:[#allocation2 + $0x450] sm:$0xff]
    %v292 = vld [vmem:[#allocation2 + $0x458] sm:$0xff]
    %v293 = vld [vmem:[#allocation2 + $0x460] sm:$0xff]
    %v294 = vld [vmem:[#allocation2 + $0x468] sm:$0xff]
    %v295 = vld [vmem:[#allocation2 + $0x470] sm:$0xff]
    %v296 = vld [vmem:[#allocation2 + $0x478] sm:$0xff]
    %v297 = vld [vmem:[#allocation2 + $0x480] sm:$0xff]
    %v298 = vld [vmem:[#allocation2 + $0x488] sm:$0xff]
    %v299 = vld [vmem:[#allocation2 + $0x490] sm:$0xff]
    %v300 = vld [vmem:[#allocation2 + $0x498] sm:$0xff]
    %v301 = vld [vmem:[#allocation2 + $0x4a0] sm:$0xff]
    %v302 = vld [vmem:[#allocation2 + $0x4a8] sm:$0xff]
    %v303 = vld [vmem:[#allocation2 + $0x4b0] sm:$0xff]
    %v304 = vld [vmem:[#allocation2 + $0x4b8] sm:$0xff]
    %v305 = vld [vmem:[#allocation2 + $0x4c0] sm:$0xff]
    %v306 = vld [vmem:[#allocation2 + $0x4c8] sm:$0xff]
    %v307 = vld [vmem:[#allocation2 + $0x4d0] sm:$0xff]
    %v308 = vld [vmem:[#allocation2 + $0x4d8] sm:$0xff]
    %v309 = vld [vmem:[#allocation2 + $0x4e0] sm:$0xff]
    %v310 = vld [vmem:[#allocation2 + $0x4e8] sm:$0xff]
    %v311 = vld [vmem:[#allocation2 + $0x4f0] sm:$0xff]
    %v312 = vld [vmem:[#allocation2 + $0x4f8] sm:$0xff]
    %v313 = vld [vmem:[#allocation2 + $0x500] sm:$0xff]
    %v314 = vld [vmem:[#allocation2 + $0x508] sm:$0xff]
    %v315 = vld [vmem:[#allocation2 + $0x510] sm:$0xff]
    %v316 = vld [vmem:[#allocation2 + $0x518] sm:$0xff]
    %v317 = vld [vmem:[#allocation2 + $0x520] sm:$0xff]
    %v318 = vld [vmem:[#allocation2 + $0x528] sm:$0xff]
    %v319 = vld [vmem:[#allocation2 + $0x530] sm:$0xff]
    %v320 = vld [vmem:[#allocation2 + $0x538] sm:$0xff]
    %v321 = vld [vmem:[#allocation2 + $0x540] sm:$0xff]
    %v322 = vld [vmem:[#allocation2 + $0x548] sm:$0xff]
    %v323 = vld [vmem:[#allocation2 + $0x550] sm:$0xff]
    %v324 = vld [vmem:[#allocation2 + $0x558] sm:$0xff]
    %v325 = vld [vmem:[#allocation2 + $0x560] sm:$0xff]
    %v326 = vld [vmem:[#allocation2 + $0x568] sm:$0xff]
    %v327 = vld [vmem:[#allocation2 + $0x570] sm:$0xff]
    %v328 = vld [vmem:[#allocation2 + $0x578] sm:$0xff]
    %v329 = vld [vmem:[#allocation2 + $0x580] sm:$0xff]
    %v330 = vld [vmem:[#allocation2 + $0x588] sm:$0xff]
    %v331 = vld [vmem:[#allocation2 + $0x590] sm:$0xff]
    %v332 = vld [vmem:[#allocation2 + $0x598] sm:$0xff]
    %v333 = vld [vmem:[#allocation2 + $0x5a0] sm:$0xff]
    %v334 = vld [vmem:[#allocation2 + $0x5a8] sm:$0xff]
    %v335 = vld [vmem:[#allocation2 + $0x5b0] sm:$0xff]
    %v336 = vld [vmem:[#allocation2 + $0x5b8] sm:$0xff]
    %v337 = vld [vmem:[#allocation2 + $0x5c0] sm:$0xff]
    %v338 = vld [vmem:[#allocation2 + $0x5c8] sm:$0xff]
    %v339 = vld [vmem:[#allocation2 + $0x5d0] sm:$0xff]
    %v340 = vld [vmem:[#allocation2 + $0x5d8] sm:$0xff]
    %v341 = vld [vmem:[#allocation2 + $0x5e0] sm:$0xff]
    %v342 = vld [vmem:[#allocation2 + $0x5e8] sm:$0xff]
    %v343 = vld [vmem:[#allocation2 + $0x5f0] sm:$0xff]
    %v344 = vld [vmem:[#allocation2 + $0x5f8] sm:$0xff]
    %v345 = vld [vmem:[#allocation2 + $0x600] sm:$0xff]
    %v346 = vld [vmem:[#allocation2 + $0x608] sm:$0xff]
    %v347 = vld [vmem:[#allocation2 + $0x610] sm:$0xff]
    %v348 = vld [vmem:[#allocation2 + $0x618] sm:$0xff]
    %v349 = vld [vmem:[#allocation2 + $0x620] sm:$0xff]
    %v350 = vld [vmem:[#allocation2 + $0x628] sm:$0xff]
    %v351 = vld [vmem:[#allocation2 + $0x630] sm:$0xff]
    %v352 = vld [vmem:[#allocation2 + $0x638] sm:$0xff]
    %v353 = vld [vmem:[#allocation2 + $0x640] sm:$0xff]
    %v354 = vld [vmem:[#allocation2 + $0x648] sm:$0xff]
    %v355 = vld [vmem:[#allocation2 + $0x650] sm:$0xff]
    %v356 = vld [vmem:[#allocation2 + $0x658] sm:$0xff]
    %v357 = vld [vmem:[#allocation2 + $0x660] sm:$0xff]
    %v358 = vld [vmem:[#allocation2 + $0x668] sm:$0xff]
    %v359 = vld [vmem:[#allocation2 + $0x670] sm:$0xff]
    %v360 = vld [vmem:[#allocation2 + $0x678] sm:$0xff]
    %v361 = vld [vmem:[#allocation2 + $0x680] sm:$0xff]
    %v362 = vld [vmem:[#allocation2 + $0x688] sm:$0xff]
    %v363 = vld [vmem:[#allocation2 + $0x690] sm:$0xff]
    %v364 = vld [vmem:[#allocation2 + $0x698] sm:$0xff]
    %v365 = vld [vmem:[#allocation2 + $0x6a0] sm:$0xff]
    %v366 = vld [vmem:[#allocation2 + $0x6a8] sm:$0xff]
    %v367 = vld [vmem:[#allocation2 + $0x6b0] sm:$0xff]
    %v368 = vld [vmem:[#allocation2 + $0x6b8] sm:$0xff]
    %v369 = vld [vmem:[#allocation2 + $0x6c0] sm:$0xff]
    %v370 = vld [vmem:[#allocation2 + $0x6c8] sm:$0xff]
    %v371 = vld [vmem:[#allocation2 + $0x6d0] sm:$0xff]
    %v372 = vld [vmem:[#allocation2 + $0x6d8] sm:$0xff]
    %v373 = vld [vmem:[#allocation2 + $0x6e0] sm:$0xff]
    %v374 = vld [vmem:[#allocation2 + $0x6e8] sm:$0xff]
    %v375 = vld [vmem:[#allocation2 + $0x6f0] sm:$0xff]
    %v376 = vld [vmem:[#allocation2 + $0x6f8] sm:$0xff]
    %v377 = vld [vmem:[#allocation2 + $0x700] sm:$0xff]
    %v378 = vld [vmem:[#allocation2 + $0x708] sm:$0xff]
    %v379 = vld [vmem:[#allocation2 + $0x710] sm:$0xff]
    %v380 = vld [vmem:[#allocation2 + $0x718] sm:$0xff]
    %v381 = vld [vmem:[#allocation2 + $0x720] sm:$0xff]
    %v382 = vld [vmem:[#allocation2 + $0x728] sm:$0xff]
    %v383 = vld [vmem:[#allocation2 + $0x730] sm:$0xff]
    %v384 = vld [vmem:[#allocation2 + $0x738] sm:$0xff]
    %v385 = vld [vmem:[#allocation2 + $0x740] sm:$0xff]
    %v386 = vld [vmem:[#allocation2 + $0x748] sm:$0xff]
    %v387 = vld [vmem:[#allocation2 + $0x750] sm:$0xff]
    %v388 = vld [vmem:[#allocation2 + $0x758] sm:$0xff]
    %v389 = vld [vmem:[#allocation2 + $0x760] sm:$0xff]
    %v390 = vld [vmem:[#allocation2 + $0x768] sm:$0xff]
    %v391 = vld [vmem:[#allocation2 + $0x770] sm:$0xff]
    %v392 = vld [vmem:[#allocation2 + $0x778] sm:$0xff]
    %v393 = vld [vmem:[#allocation2 + $0x780] sm:$0xff]
    %v394 = vld [vmem:[#allocation2 + $0x788] sm:$0xff]
    %v395 = vld [vmem:[#allocation2 + $0x790] sm:$0xff]
    %v396 = vld [vmem:[#allocation2 + $0x798] sm:$0xff]
    %v397 = vld [vmem:[#allocation2 + $0x7a0] sm:$0xff]
    %v398 = vld [vmem:[#allocation2 + $0x7a8] sm:$0xff]
    %v399 = vld [vmem:[#allocation2 + $0x7b0] sm:$0xff]
    %v400 = vld [vmem:[#allocation2 + $0x7b8] sm:$0xff]
    %v401 = vld [vmem:[#allocation2 + $0x7c0] sm:$0xff]
    %v402 = vld [vmem:[#allocation2 + $0x7c8] sm:$0xff]
    %v403 = vld [vmem:[#allocation2 + $0x7d0] sm:$0xff]
    %v404 = vld [vmem:[#allocation2 + $0x7d8] sm:$0xff]
    %v405 = vld [vmem:[#allocation2 + $0x7e0] sm:$0xff]
    %v406 = vld [vmem:[#allocation2 + $0x7e8] sm:$0xff]
    %v407 = vld [vmem:[#allocation2 + $0x7f0] sm:$0xff]
    %v408 = vld [vmem:[#allocation2 + $0x7f8] sm:$0xff]
    %v409 = vld [vmem:[#allocation2 + $0x800] sm:$0xff]
    %v410 = vld [vmem:[#allocation2 + $0x808] sm:$0xff]
    %v411 = vld [vmem:[#allocation2 + $0x810] sm:$0xff]
    %v412 = vld [vmem:[#allocation2 + $0x818] sm:$0xff]
    %v413 = vld [vmem:[#allocation2 + $0x820] sm:$0xff]
    %v414 = vld [vmem:[#allocation2 + $0x828] sm:$0xff]
    %v415 = vld [vmem:[#allocation2 + $0x830] sm:$0xff]
    %v416 = vld [vmem:[#allocation2 + $0x838] sm:$0xff]
    %v417 = vld [vmem:[#allocation2 + $0x840] sm:$0xff]
    %v418 = vld [vmem:[#allocation2 + $0x848] sm:$0xff]
    %v419 = vld [vmem:[#allocation2 + $0x850] sm:$0xff]
    %v420 = vld [vmem:[#allocation2 + $0x858] sm:$0xff]
    %v421 = vld [vmem:[#allocation2 + $0x860] sm:$0xff]
    %v422 = vld [vmem:[#allocation2 + $0x868] sm:$0xff]
    %v423 = vld [vmem:[#allocation2 + $0x870] sm:$0xff]
    %v424 = vld [vmem:[#allocation2 + $0x878] sm:$0xff]
    %v425 = vld [vmem:[#allocation2 + $0x880] sm:$0xff]
    %v426 = vld [vmem:[#allocation2 + $0x888] sm:$0xff]
    %v427 = vld [vmem:[#allocation2 + $0x890] sm:$0xff]
    %v428 = vld [vmem:[#allocation2 + $0x898] sm:$0xff]
    %v429 = vld [vmem:[#allocation2 + $0x8a0] sm:$0xff]
    %v430 = vld [vmem:[#allocation2 + $0x8a8] sm:$0xff]
    %v431 = vld [vmem:[#allocation2 + $0x8b0] sm:$0xff]
    %v432 = vld [vmem:[#allocation2 + $0x8b8] sm:$0xff]
    %v433 = vld [vmem:[#allocation2 + $0x8c0] sm:$0xff]
    %v434 = vld [vmem:[#allocation2 + $0x8c8] sm:$0xff]
    %v435 = vld [vmem:[#allocation2 + $0x8d0] sm:$0xff]
    %v436 = vld [vmem:[#allocation2 + $0x8d8] sm:$0xff]
    %v437 = vld [vmem:[#allocation2 + $0x8e0] sm:$0xff]
    %v438 = vld [vmem:[#allocation2 + $0x8e8] sm:$0xff]
    %v439 = vld [vmem:[#allocation2 + $0x8f0] sm:$0xff]
    %v440 = vld [vmem:[#allocation2 + $0x8f8] sm:$0xff]
    %v441 = vld [vmem:[#allocation2 + $0x900] sm:$0xff]
    %v442 = vld [vmem:[#allocation2 + $0x908] sm:$0xff]
    %v443 = vld [vmem:[#allocation2 + $0x910] sm:$0xff]
    %v444 = vld [vmem:[#allocation2 + $0x918] sm:$0xff]
    %v445 = vld [vmem:[#allocation2 + $0x920] sm:$0xff]
    %v446 = vld [vmem:[#allocation2 + $0x928] sm:$0xff]
    %v447 = vld [vmem:[#allocation2 + $0x930] sm:$0xff]
    %v448 = vld [vmem:[#allocation2 + $0x938] sm:$0xff]
    %v449 = vld [vmem:[#allocation2 + $0x940] sm:$0xff]
    %v450 = vld [vmem:[#allocation2 + $0x948] sm:$0xff]
    %v451 = vld [vmem:[#allocation2 + $0x950] sm:$0xff]
    %v452 = vld [vmem:[#allocation2 + $0x958] sm:$0xff]
    %v453 = vld [vmem:[#allocation2 + $0x960] sm:$0xff]
    %v454 = vld [vmem:[#allocation2 + $0x968] sm:$0xff]
    %v455 = vld [vmem:[#allocation2 + $0x970] sm:$0xff]
    %v456 = vld [vmem:[#allocation2 + $0x978] sm:$0xff]
    %v457 = vld [vmem:[#allocation2 + $0x980] sm:$0xff]
    %v458 = vld [vmem:[#allocation2 + $0x988] sm:$0xff]
    %v459 = vld [vmem:[#allocation2 + $0x990] sm:$0xff]
    %v460 = vld [vmem:[#allocation2 + $0x998] sm:$0xff]
    %v461 = vld [vmem:[#allocation2 + $0x9a0] sm:$0xff]
    %v462 = vld [vmem:[#allocation2 + $0x9a8] sm:$0xff]
    %v463 = vld [vmem:[#allocation2 + $0x9b0] sm:$0xff]
    %v464 = vld [vmem:[#allocation2 + $0x9b8] sm:$0xff]
    %v465 = vld [vmem:[#allocation2 + $0x9c0] sm:$0xff]
    %v466 = vld [vmem:[#allocation2 + $0x9c8] sm:$0xff]
    %v467 = vld [vmem:[#allocation2 + $0x9d0] sm:$0xff]
    %v468 = vld [vmem:[#allocation2 + $0x9d8] sm:$0xff]
    %v469 = vld [vmem:[#allocation2 + $0x9e0] sm:$0xff]
    %v470 = vld [vmem:[#allocation2 + $0x9e8] sm:$0xff]
    %v471 = vld [vmem:[#allocation2 + $0x9f0] sm:$0xff]
    %v472 = vld [vmem:[#allocation2 + $0x9f8] sm:$0xff]
    %v473 = vld [vmem:[#allocation2 + $0xa00] sm:$0xff]
    %v474 = vld [vmem:[#allocation2 + $0xa08] sm:$0xff]
    %v475 = vld [vmem:[#allocation2 + $0xa10] sm:$0xff]
    %v476 = vld [vmem:[#allocation2 + $0xa18] sm:$0xff]
    %v477 = vld [vmem:[#allocation2 + $0xa20] sm:$0xff]
    %v478 = vld [vmem:[#allocation2 + $0xa28] sm:$0xff]
    %v479 = vld [vmem:[#allocation2 + $0xa30] sm:$0xff]
    %v480 = vld [vmem:[#allocation2 + $0xa38] sm:$0xff]
    %v481 = vld [vmem:[#allocation2 + $0xa40] sm:$0xff]
    %v482 = vld [vmem:[#allocation2 + $0xa48] sm:$0xff]
    %v483 = vld [vmem:[#allocation2 + $0xa50] sm:$0xff]
    %v484 = vld [vmem:[#allocation2 + $0xa58] sm:$0xff]
    %v485 = vld [vmem:[#allocation2 + $0xa60] sm:$0xff]
    %v486 = vld [vmem:[#allocation2 + $0xa68] sm:$0xff]
    %v487 = vld [vmem:[#allocation2 + $0xa70] sm:$0xff]
    %v488 = vld [vmem:[#allocation2 + $0xa78] sm:$0xff]
    %v489 = vld [vmem:[#allocation2 + $0xa80] sm:$0xff]
    %v490 = vld [vmem:[#allocation2 + $0xa88] sm:$0xff]
    %v491 = vld [vmem:[#allocation2 + $0xa90] sm:$0xff]
    %v492 = vld [vmem:[#allocation2 + $0xa98] sm:$0xff]
    %v493 = vld [vmem:[#allocation2 + $0xaa0] sm:$0xff]
    %v494 = vld [vmem:[#allocation2 + $0xaa8] sm:$0xff]
    %v495 = vld [vmem:[#allocation2 + $0xab0] sm:$0xff]
    %v496 = vld [vmem:[#allocation2 + $0xab8] sm:$0xff]
    %v497 = vld [vmem:[#allocation2 + $0xac0] sm:$0xff]
    %v498 = vld [vmem:[#allocation2 + $0xac8] sm:$0xff]
    %v499 = vld [vmem:[#allocation2 + $0xad0] sm:$0xff]
    %v500 = vld [vmem:[#allocation2 + $0xad8] sm:$0xff]
    %v501 = vld [vmem:[#allocation2 + $0xae0] sm:$0xff]
    %v502 = vld [vmem:[#allocation2 + $0xae8] sm:$0xff]
    %v503 = vld [vmem:[#allocation2 + $0xaf0] sm:$0xff]
    %v504 = vld [vmem:[#allocation2 + $0xaf8] sm:$0xff]
    %v505 = vld [vmem:[#allocation2 + $0xb00] sm:$0xff]
    %v506 = vld [vmem:[#allocation2 + $0xb08] sm:$0xff]
    %v507 = vld [vmem:[#allocation2 + $0xb10] sm:$0xff]
    %v508 = vld [vmem:[#allocation2 + $0xb18] sm:$0xff]
    %v509 = vld [vmem:[#allocation2 + $0xb20] sm:$0xff]
    %v510 = vld [vmem:[#allocation2 + $0xb28] sm:$0xff]
    %v511 = vld [vmem:[#allocation2 + $0xb30] sm:$0xff]
    %v512 = vld [vmem:[#allocation2 + $0xb38] sm:$0xff]
    %v513 = vld [vmem:[#allocation2 + $0xb40] sm:$0xff]
    %v514 = vld [vmem:[#allocation2 + $0xb48] sm:$0xff]
    %v515 = vld [vmem:[#allocation2 + $0xb50] sm:$0xff]
    %v516 = vld [vmem:[#allocation2 + $0xb58] sm:$0xff]
    %v517 = vld [vmem:[#allocation2 + $0xb60] sm:$0xff]
    %v518 = vld [vmem:[#allocation2 + $0xb68] sm:$0xff]
    %v519 = vld [vmem:[#allocation2 + $0xb70] sm:$0xff]
    %v520 = vld [vmem:[#allocation2 + $0xb78] sm:$0xff]
    %v521 = vld [vmem:[#allocation2 + $0xb80] sm:$0xff]
    %v522 = vld [vmem:[#allocation2 + $0xb88] sm:$0xff]
    %v523 = vld [vmem:[#allocation2 + $0xb90] sm:$0xff]
    %v524 = vld [vmem:[#allocation2 + $0xb98] sm:$0xff]
    %v525 = vld [vmem:[#allocation2 + $0xba0] sm:$0xff]
    %v526 = vld [vmem:[#allocation2 + $0xba8] sm:$0xff]
    %v527 = vld [vmem:[#allocation2 + $0xbb0] sm:$0xff]
    %v528 = vld [vmem:[#allocation2 + $0xbb8] sm:$0xff]
    %v529 = vld [vmem:[#allocation2 + $0xbc0] sm:$0xff]
    %v530 = vld [vmem:[#allocation2 + $0xbc8] sm:$0xff]
    %v531 = vld [vmem:[#allocation2 + $0xbd0] sm:$0xff]
    %v532 = vld [vmem:[#allocation2 + $0xbd8] sm:$0xff]
    %v533 = vld [vmem:[#allocation2 + $0xbe0] sm:$0xff]
    %v534 = vld [vmem:[#allocation2 + $0xbe8] sm:$0xff]
    %v535 = vld [vmem:[#allocation2 + $0xbf0] sm:$0xff]
    %v536 = vld [vmem:[#allocation2 + $0xbf8] sm:$0xff]
    %v537 = vld [vmem:[#allocation2 + $0xc00] sm:$0xff]
    %v538 = vld [vmem:[#allocation2 + $0xc08] sm:$0xff]
    %v539 = vld [vmem:[#allocation2 + $0xc10] sm:$0xff]
    %v540 = vld [vmem:[#allocation2 + $0xc18] sm:$0xff]
    %v541 = vld [vmem:[#allocation2 + $0xc20] sm:$0xff]
    %v542 = vld [vmem:[#allocation2 + $0xc28] sm:$0xff]
    %v543 = vld [vmem:[#allocation2 + $0xc30] sm:$0xff]
    %v544 = vld [vmem:[#allocation2 + $0xc38] sm:$0xff]
    %v545 = vld [vmem:[#allocation2 + $0xc40] sm:$0xff]
    %v546 = vld [vmem:[#allocation2 + $0xc48] sm:$0xff]
    %v547 = vld [vmem:[#allocation2 + $0xc50] sm:$0xff]
    %v548 = vld [vmem:[#allocation2 + $0xc58] sm:$0xff]
    %v549 = vld [vmem:[#allocation2 + $0xc60] sm:$0xff]
    %v550 = vld [vmem:[#allocation2 + $0xc68] sm:$0xff]
    %v551 = vld [vmem:[#allocation2 + $0xc70] sm:$0xff]
    %v552 = vld [vmem:[#allocation2 + $0xc78] sm:$0xff]
    %v553 = vld [vmem:[#allocation2 + $0xc80] sm:$0xff]
    %v554 = vld [vmem:[#allocation2 + $0xc88] sm:$0xff]
    %v555 = vld [vmem:[#allocation2 + $0xc90] sm:$0xff]
    %v556 = vld [vmem:[#allocation2 + $0xc98] sm:$0xff]
    %v557 = vld [vmem:[#allocation2 + $0xca0] sm:$0xff]
    %v558 = vld [vmem:[#allocation2 + $0xca8] sm:$0xff]
    %v559 = vld [vmem:[#allocation2 + $0xcb0] sm:$0xff]
    %v560 = vld [vmem:[#allocation2 + $0xcb8] sm:$0xff]
    %v561 = vld [vmem:[#allocation2 + $0xcc0] sm:$0xff]
    %v562 = vld [vmem:[#allocation2 + $0xcc8] sm:$0xff]
    %v563 = vld [vmem:[#allocation2 + $0xcd0] sm:$0xff]
    %v564 = vld [vmem:[#allocation2 + $0xcd8] sm:$0xff]
    %v565 = vld [vmem:[#allocation2 + $0xce0] sm:$0xff]
    %v566 = vld [vmem:[#allocation2 + $0xce8] sm:$0xff]
    %v567 = vld [vmem:[#allocation2 + $0xcf0] sm:$0xff]
    %v568 = vld [vmem:[#allocation2 + $0xcf8] sm:$0xff]
    %v569 = vld [vmem:[#allocation2 + $0xd00] sm:$0xff]
    %v570 = vld [vmem:[#allocation2 + $0xd08] sm:$0xff]
    %v571 = vld [vmem:[#allocation2 + $0xd10] sm:$0xff]
    %v572 = vld [vmem:[#allocation2 + $0xd18] sm:$0xff]
    %v573 = vld [vmem:[#allocation2 + $0xd20] sm:$0xff]
    %v574 = vld [vmem:[#allocation2 + $0xd28] sm:$0xff]
    %v575 = vld [vmem:[#allocation2 + $0xd30] sm:$0xff]
    %v576 = vld [vmem:[#allocation2 + $0xd38] sm:$0xff]
    %v577 = vld [vmem:[#allocation2 + $0xd40] sm:$0xff]
    %v578 = vld [vmem:[#allocation2 + $0xd48] sm:$0xff]
    %v579 = vld [vmem:[#allocation2 + $0xd50] sm:$0xff]
    %v580 = vld [vmem:[#allocation2 + $0xd58] sm:$0xff]
    %v581 = vld [vmem:[#allocation2 + $0xd60] sm:$0xff]
    %v582 = vld [vmem:[#allocation2 + $0xd68] sm:$0xff]
    %v583 = vld [vmem:[#allocation2 + $0xd70] sm:$0xff]
    %v584 = vld [vmem:[#allocation2 + $0xd78] sm:$0xff]
    %v585 = vld [vmem:[#allocation2 + $0xd80] sm:$0xff]
    %v586 = vld [vmem:[#allocation2 + $0xd88] sm:$0xff]
    %v587 = vld [vmem:[#allocation2 + $0xd90] sm:$0xff]
    %v588 = vld [vmem:[#allocation2 + $0xd98] sm:$0xff]
    %v589 = vld [vmem:[#allocation2 + $0xda0] sm:$0xff]
    %v590 = vld [vmem:[#allocation2 + $0xda8] sm:$0xff]
    %v591 = vld [vmem:[#allocation2 + $0xdb0] sm:$0xff]
    %v592 = vld [vmem:[#allocation2 + $0xdb8] sm:$0xff]
    %v593 = vld [vmem:[#allocation2 + $0xdc0] sm:$0xff]
    %v594 = vld [vmem:[#allocation2 + $0xdc8] sm:$0xff]
    %v595 = vld [vmem:[#allocation2 + $0xdd0] sm:$0xff]
    %v596 = vld [vmem:[#allocation2 + $0xdd8] sm:$0xff]
    %v597 = vld [vmem:[#allocation2 + $0xde0] sm:$0xff]
    %v598 = vld [vmem:[#allocation2 + $0xde8] sm:$0xff]
    %v599 = vld [vmem:[#allocation2 + $0xdf0] sm:$0xff]
    %v600 = vld [vmem:[#allocation2 + $0xdf8] sm:$0xff]
    %v601 = vld [vmem:[#allocation2 + $0xe00] sm:$0xff]
    %v602 = vld [vmem:[#allocation2 + $0xe08] sm:$0xff]
    %v603 = vld [vmem:[#allocation2 + $0xe10] sm:$0xff]
    %v604 = vld [vmem:[#allocation2 + $0xe18] sm:$0xff]
    %v605 = vld [vmem:[#allocation2 + $0xe20] sm:$0xff]
    %v606 = vld [vmem:[#allocation2 + $0xe28] sm:$0xff]
    %v607 = vld [vmem:[#allocation2 + $0xe30] sm:$0xff]
    %v608 = vld [vmem:[#allocation2 + $0xe38] sm:$0xff]
    %v609 = vld [vmem:[#allocation2 + $0xe40] sm:$0xff]
    %v610 = vld [vmem:[#allocation2 + $0xe48] sm:$0xff]
    %v611 = vld [vmem:[#allocation2 + $0xe50] sm:$0xff]
    %v612 = vld [vmem:[#allocation2 + $0xe58] sm:$0xff]
    %v613 = vld [vmem:[#allocation2 + $0xe60] sm:$0xff]
    %v614 = vld [vmem:[#allocation2 + $0xe68] sm:$0xff]
    %v615 = vld [vmem:[#allocation2 + $0xe70] sm:$0xff]
    %v616 = vld [vmem:[#allocation2 + $0xe78] sm:$0xff]
    %v617 = vld [vmem:[#allocation2 + $0xe80] sm:$0xff]
    %v618 = vld [vmem:[#allocation2 + $0xe88] sm:$0xff]
    %v619 = vld [vmem:[#allocation2 + $0xe90] sm:$0xff]
    %v620 = vld [vmem:[#allocation2 + $0xe98] sm:$0xff]
    %v621 = vld [vmem:[#allocation2 + $0xea0] sm:$0xff]
    %v622 = vld [vmem:[#allocation2 + $0xea8] sm:$0xff]
    %v623 = vld [vmem:[#allocation2 + $0xeb0] sm:$0xff]
    %v624 = vld [vmem:[#allocation2 + $0xeb8] sm:$0xff]
    %v625 = vld [vmem:[#allocation2 + $0xec0] sm:$0xff]
    %v626 = vld [vmem:[#allocation2 + $0xec8] sm:$0xff]
    %v627 = vld [vmem:[#allocation2 + $0xed0] sm:$0xff]
    %v628 = vld [vmem:[#allocation2 + $0xed8] sm:$0xff]
    %v629 = vld [vmem:[#allocation2 + $0xee0] sm:$0xff]
    %v630 = vld [vmem:[#allocation2 + $0xee8] sm:$0xff]
    %v631 = vld [vmem:[#allocation2 + $0xef0] sm:$0xff]
    %v632 = vld [vmem:[#allocation2 + $0xef8] sm:$0xff]
    %v633 = vld [vmem:[#allocation2 + $0xf00] sm:$0xff]
    %v634 = vld [vmem:[#allocation2 + $0xf08] sm:$0xff]
    %v635 = vld [vmem:[#allocation2 + $0xf10] sm:$0xff]
    %v636 = vld [vmem:[#allocation2 + $0xf18] sm:$0xff]
    %v637 = vld [vmem:[#allocation2 + $0xf20] sm:$0xff]
    %v638 = vld [vmem:[#allocation2 + $0xf28] sm:$0xff]
    %v639 = vld [vmem:[#allocation2 + $0xf30] sm:$0xff]
    %v640 = vld [vmem:[#allocation2 + $0xf38] sm:$0xff]
    %v641 = vld [vmem:[#allocation2 + $0xf40] sm:$0xff]
    %v642 = vld [vmem:[#allocation2 + $0xf48] sm:$0xff]
    %v643 = vld [vmem:[#allocation2 + $0xf50] sm:$0xff]
    %v644 = vld [vmem:[#allocation2 + $0xf58] sm:$0xff]
    %v645 = vld [vmem:[#allocation2 + $0xf60] sm:$0xff]
    %v646 = vld [vmem:[#allocation2 + $0xf68] sm:$0xff]
    %v647 = vld [vmem:[#allocation2 + $0xf70] sm:$0xff]
    %v648 = vld [vmem:[#allocation2 + $0xf78] sm:$0xff]
    %v649 = vld [vmem:[#allocation2 + $0xf80] sm:$0xff]
    %v650 = vld [vmem:[#allocation2 + $0xf88] sm:$0xff]
    %v651 = vld [vmem:[#allocation2 + $0xf90] sm:$0xff]
    %v652 = vld [vmem:[#allocation2 + $0xf98] sm:$0xff]
    %v653 = vld [vmem:[#allocation2 + $0xfa0] sm:$0xff]
    %v654 = vld [vmem:[#allocation2 + $0xfa8] sm:$0xff]
    %v655 = vld [vmem:[#allocation2 + $0xfb0] sm:$0xff]
    %v656 = vld [vmem:[#allocation2 + $0xfb8] sm:$0xff]
    %v657 = vld [vmem:[#allocation2 + $0xfc0] sm:$0xff]
    %v658 = vld [vmem:[#allocation2 + $0xfc8] sm:$0xff]
    %v659 = vld [vmem:[#allocation2 + $0xfd0] sm:$0xff]
    %v660 = vld [vmem:[#allocation2 + $0xfd8] sm:$0xff]
    %v661 = vld [vmem:[#allocation2 + $0xfe0] sm:$0xff]
    %v662 = vld [vmem:[#allocation2 + $0xfe8] sm:$0xff]
    %v663 = vld [vmem:[#allocation2 + $0xff0] sm:$0xff]
    %v664 = vld [vmem:[#allocation2 + $0xff8] sm:$0xff]
    %665 = vmatprep.subr.mxu0 0.0
    %666 = vmatpush1.msra.mxu0 %v168
    %667 = vmatprep.subr.mxu0 0.0
    %668 = vmatpush1.msra.mxu0 %v167
    %669 = vmatprep.subr.mxu0 0.0
    %670 = vmatpush1.msra.mxu0 %v166
    %671 = vmatprep.subr.mxu0 0.0
    %672 = vmatpush1.msra.mxu0 %v165
    %673 = vmatprep.subr.mxu0 0.0
    %674 = vmatpush1.msra.mxu0 %v164
    %675 = vmatprep.subr.mxu0 0.0
    %676 = vmatpush1.msra.mxu0 %v163
    %677 = vmatprep.subr.mxu0 0.0
    %678 = vmatpush1.msra.mxu0 %v162
    %679 = vmatprep.subr.mxu0 0.0
    %680 = vmatpush1.msra.mxu0 %v161
    %681 = vmatprep.subr.mxu0 0.0
    %682 = vmatpush1.msra.mxu0 %v160
    %683 = vmatprep.subr.mxu0 0.0
    %684 = vmatpush1.msra.mxu0 %v159
    %685 = vmatprep.subr.mxu0 0.0
    %686 = vmatpush1.msra.mxu0 %v158
    %687 = vmatprep.subr.mxu0 0.0
    %688 = vmatpush1.msra.mxu0 %v157
    %689 = vmatprep.subr.mxu0 0.0
    %690 = vmatpush1.msra.mxu0 %v156
    %691 = vmatprep.subr.mxu0 0.0
    %692 = vmatpush1.msra.mxu0 %v155
    %693 = vmatprep.subr.mxu0 0.0
    %694 = vmatpush1.msra.mxu0 %v154
    %695 = vmatprep.subr.mxu0 0.0
    %696 = vmatpush1.msra.mxu0 %v153
    %697 = vmatprep.subr.mxu0 0.0
    %698 = vmatpush2.msra.mxu0 %v184
    %699 = vmatprep.subr.mxu0 0.0
    %700 = vmatpush2.msra.mxu0 %v183
    %701 = vmatprep.subr.mxu0 0.0
    %702 = vmatpush2.msra.mxu0 %v182
    %703 = vmatprep.subr.mxu0 0.0
    %704 = vmatpush2.msra.mxu0 %v181
    %705 = vmatprep.subr.mxu0 0.0
    %706 = vmatpush2.msra.mxu0 %v180
    %707 = vmatprep.subr.mxu0 0.0
    %708 = vmatpush2.msra.mxu0 %v179
    %709 = vmatprep.subr.mxu0 0.0
    %710 = vmatpush2.msra.mxu0 %v178
    %711 = vmatprep.subr.mxu0 0.0
    %712 = vmatpush2.msra.mxu0 %v177
    %713 = vmatprep.subr.mxu0 0.0
    %714 = vmatpush2.msra.mxu0 %v176
    %715 = vmatprep.subr.mxu0 0.0
    %716 = vmatpush2.msra.mxu0 %v175
    %717 = vmatprep.subr.mxu0 0.0
    %718 = vmatpush2.msra.mxu0 %v174
    %719 = vmatprep.subr.mxu0 0.0
    %720 = vmatpush2.msra.mxu0 %v173
    %721 = vmatprep.subr.mxu0 0.0
    %722 = vmatpush2.msra.mxu0 %v172
    %723 = vmatprep.subr.mxu0 0.0
    %724 = vmatpush2.msra.mxu0 %v171
    %725 = vmatprep.subr.mxu0 0.0
    %726 = vmatpush2.msra.mxu0 %v170
    %727 = vmatprep.subr.mxu0 0.0
    %728 = vmatpush2.msra.mxu0 %v169
    %729 = vmatprep.mubr.f32.mxu0 %v26
    %730 = vmatmul.mubr.f32.gmra.mxu0 %v25
    %v731 = vpop.f32.mrf.mxu0
    %v732 = vadd.f32 0.0, %v731
    %v733 = vpop.f32.mrf.mxu0
    %734 = vmatprep.mubr.f32.mxu0 %v58
    %735 = vmatmul.mubr.f32.gmra.mxu0 %v57
    %v736 = vpop.f32.mrf.mxu0
    %v737 = vadd.f32 0.0, %v736
    %v738 = vpop.f32.mrf.mxu0
    %739 = vmatprep.mubr.f32.mxu0 %v90
    %740 = vmatmul.mubr.f32.gmra.mxu0 %v89
    %v741 = vpop.f32.mrf.mxu0
    %v742 = vadd.f32 0.0, %v741
    %v743 = vpop.f32.mrf.mxu0
    %744 = vmatprep.mubr.f32.mxu0 %v122
    %745 = vmatmul.mubr.f32.gmra.mxu0 %v121
    %v746 = vpop.f32.mrf.mxu0
    %v747 = vadd.f32 0.0, %v746
    %v748 = vpop.f32.mrf.mxu0
    %749 = vdwg.mxu0
    %750 = vmatprep.subr.mxu0 0.0
    %751 = vmatpush1.msra.mxu0 %v200
    %752 = vmatprep.subr.mxu0 0.0
    %753 = vmatpush1.msra.mxu0 %v199
    %754 = vmatprep.subr.mxu0 0.0
    %755 = vmatpush1.msra.mxu0 %v198
    %756 = vmatprep.subr.mxu0 0.0
    %757 = vmatpush1.msra.mxu0 %v197
    %758 = vmatprep.subr.mxu0 0.0
    %759 = vmatpush1.msra.mxu0 %v196
    %760 = vmatprep.subr.mxu0 0.0
    %761 = vmatpush1.msra.mxu0 %v195
    %762 = vmatprep.subr.mxu0 0.0
    %763 = vmatpush1.msra.mxu0 %v194
    %764 = vmatprep.subr.mxu0 0.0
    %765 = vmatpush1.msra.mxu0 %v193
    %766 = vmatprep.subr.mxu0 0.0
    %767 = vmatpush1.msra.mxu0 %v192
    %768 = vmatprep.subr.mxu0 0.0
    %769 = vmatpush1.msra.mxu0 %v191
    %770 = vmatprep.subr.mxu0 0.0
    %771 = vmatpush1.msra.mxu0 %v190
    %772 = vmatprep.subr.mxu0 0.0
    %773 = vmatpush1.msra.mxu0 %v189
    %774 = vmatprep.subr.mxu0 0.0
    %775 = vmatpush1.msra.mxu0 %v188
    %776 = vmatprep.subr.mxu0 0.0
    %777 = vmatpush1.msra.mxu0 %v187
    %778 = vmatprep.subr.mxu0 0.0
    %779 = vmatpush1.msra.mxu0 %v186
    %780 = vmatprep.subr.mxu0 0.0
    %781 = vmatpush1.msra.mxu0 %v185
    %782 = vmatprep.subr.mxu0 0.0
    %783 = vmatpush2.msra.mxu0 %v216
    %784 = vmatprep.subr.mxu0 0.0
    %785 = vmatpush2.msra.mxu0 %v215
    %786 = vmatprep.subr.mxu0 0.0
    %787 = vmatpush2.msra.mxu0 %v214
    %788 = vmatprep.subr.mxu0 0.0
    %789 = vmatpush2.msra.mxu0 %v213
    %790 = vmatprep.subr.mxu0 0.0
    %791 = vmatpush2.msra.mxu0 %v212
    %792 = vmatprep.subr.mxu0 0.0
    %793 = vmatpush2.msra.mxu0 %v211
    %794 = vmatprep.subr.mxu0 0.0
    %795 = vmatpush2.msra.mxu0 %v210
    %796 = vmatprep.subr.mxu0 0.0
    %797 = vmatpush2.msra.mxu0 %v209
    %798 = vmatprep.subr.mxu0 0.0
    %799 = vmatpush2.msra.mxu0 %v208
    %800 = vmatprep.subr.mxu0 0.0
    %801 = vmatpush2.msra.mxu0 %v207
    %802 = vmatprep.subr.mxu0 0.0
    %803 = vmatpush2.msra.mxu0 %v206
    %804 = vmatprep.subr.mxu0 0.0
    %805 = vmatpush2.msra.mxu0 %v205
    %806 = vmatprep.subr.mxu0 0.0
    %807 = vmatpush2.msra.mxu0 %v204
    %808 = vmatprep.subr.mxu0 0.0
    %809 = vmatpush2.msra.mxu0 %v203
    %810 = vmatprep.subr.mxu0 0.0
    %811 = vmatpush2.msra.mxu0 %v202
    %812 = vmatprep.subr.mxu0 0.0
    %813 = vmatpush2.msra.mxu0 %v201
    %814 = vmatprep.mubr.f32.mxu0 %v28
    %815 = vmatmul.mubr.f32.gmra.mxu0 %v27
    %v816 = vpop.f32.mrf.mxu0
    %v817 = vadd.f32 %v732, %v816
    %v818 = vpop.f32.mrf.mxu0
    %819 = vmatprep.mubr.f32.mxu0 %v60
    %820 = vmatmul.mubr.f32.gmra.mxu0 %v59
    %v821 = vpop.f32.mrf.mxu0
    %v822 = vadd.f32 %v737, %v821
    %v823 = vpop.f32.mrf.mxu0
    %824 = vmatprep.mubr.f32.mxu0 %v92
    %825 = vmatmul.mubr.f32.gmra.mxu0 %v91
    %v826 = vpop.f32.mrf.mxu0
    %v827 = vadd.f32 %v742, %v826
    %v828 = vpop.f32.mrf.mxu0
    %829 = vmatprep.mubr.f32.mxu0 %v124
    %830 = vmatmul.mubr.f32.gmra.mxu0 %v123
    %v831 = vpop.f32.mrf.mxu0
    %v832 = vadd.f32 %v747, %v831
    %v833 = vpop.f32.mrf.mxu0
    %834 = vdwg.mxu0
    %835 = vmatprep.subr.mxu0 0.0
    %836 = vmatpush1.msra.mxu0 %v232
    %837 = vmatprep.subr.mxu0 0.0
    %838 = vmatpush1.msra.mxu0 %v231
    %839 = vmatprep.subr.mxu0 0.0
    %840 = vmatpush1.msra.mxu0 %v230
    %841 = vmatprep.subr.mxu0 0.0
    %842 = vmatpush1.msra.mxu0 %v229
    %843 = vmatprep.subr.mxu0 0.0
    %844 = vmatpush1.msra.mxu0 %v228
    %845 = vmatprep.subr.mxu0 0.0
    %846 = vmatpush1.msra.mxu0 %v227
    %847 = vmatprep.subr.mxu0 0.0
    %848 = vmatpush1.msra.mxu0 %v226
    %849 = vmatprep.subr.mxu0 0.0
    %850 = vmatpush1.msra.mxu0 %v225
    %851 = vmatprep.subr.mxu0 0.0
    %852 = vmatpush1.msra.mxu0 %v224
    %853 = vmatprep.subr.mxu0 0.0
    %854 = vmatpush1.msra.mxu0 %v223
    %855 = vmatprep.subr.mxu0 0.0
    %856 = vmatpush1.msra.mxu0 %v222
    %857 = vmatprep.subr.mxu0 0.0
    %858 = vmatpush1.msra.mxu0 %v221
    %859 = vmatprep.subr.mxu0 0.0
    %860 = vmatpush1.msra.mxu0 %v220
    %861 = vmatprep.subr.mxu0 0.0
    %862 = vmatpush1.msra.mxu0 %v219
    %863 = vmatprep.subr.mxu0 0.0
    %864 = vmatpush1.msra.mxu0 %v218
    %865 = vmatprep.subr.mxu0 0.0
    %866 = vmatpush1.msra.mxu0 %v217
    %867 = vmatprep.subr.mxu0 0.0
    %868 = vmatpush2.msra.mxu0 %v248
    %869 = vmatprep.subr.mxu0 0.0
    %870 = vmatpush2.msra.mxu0 %v247
    %871 = vmatprep.subr.mxu0 0.0
    %872 = vmatpush2.msra.mxu0 %v246
    %873 = vmatprep.subr.mxu0 0.0
    %874 = vmatpush2.msra.mxu0 %v245
    %875 = vmatprep.subr.mxu0 0.0
    %876 = vmatpush2.msra.mxu0 %v244
    %877 = vmatprep.subr.mxu0 0.0
    %878 = vmatpush2.msra.mxu0 %v243
    %879 = vmatprep.subr.mxu0 0.0
    %880 = vmatpush2.msra.mxu0 %v242
    %881 = vmatprep.subr.mxu0 0.0
    %882 = vmatpush2.msra.mxu0 %v241
    %883 = vmatprep.subr.mxu0 0.0
    %884 = vmatpush2.msra.mxu0 %v240
    %885 = vmatprep.subr.mxu0 0.0
    %886 = vmatpush2.msra.mxu0 %v239
    %887 = vmatprep.subr.mxu0 0.0
    %888 = vmatpush2.msra.mxu0 %v238
    %889 = vmatprep.subr.mxu0 0.0
    %890 = vmatpush2.msra.mxu0 %v237
    %891 = vmatprep.subr.mxu0 0.0
    %892 = vmatpush2.msra.mxu0 %v236
    %893 = vmatprep.subr.mxu0 0.0
    %894 = vmatpush2.msra.mxu0 %v235
    %895 = vmatprep.subr.mxu0 0.0
    %896 = vmatpush2.msra.mxu0 %v234
    %897 = vmatprep.subr.mxu0 0.0
    %898 = vmatpush2.msra.mxu0 %v233
    %899 = vmatprep.mubr.f32.mxu0 %v30
    %900 = vmatmul.mubr.f32.gmra.mxu0 %v29
    %v901 = vpop.f32.mrf.mxu0
    %v902 = vadd.f32 %v817, %v901
    %v903 = vpop.f32.mrf.mxu0
    %904 = vmatprep.mubr.f32.mxu0 %v62
    %905 = vmatmul.mubr.f32.gmra.mxu0 %v61
    %v906 = vpop.f32.mrf.mxu0
    %v907 = vadd.f32 %v822, %v906
    %v908 = vpop.f32.mrf.mxu0
    %909 = vmatprep.mubr.f32.mxu0 %v94
    %910 = vmatmul.mubr.f32.gmra.mxu0 %v93
    %v911 = vpop.f32.mrf.mxu0
    %v912 = vadd.f32 %v827, %v911
    %v913 = vpop.f32.mrf.mxu0
    %914 = vmatprep.mubr.f32.mxu0 %v126
    %915 = vmatmul.mubr.f32.gmra.mxu0 %v125
    %v916 = vpop.f32.mrf.mxu0
    %v917 = vadd.f32 %v832, %v916
    %v918 = vpop.f32.mrf.mxu0
    %919 = vdwg.mxu0
    %920 = vmatprep.subr.mxu0 0.0
    %921 = vmatpush1.msra.mxu0 %v264
    %922 = vmatprep.subr.mxu0 0.0
    %923 = vmatpush1.msra.mxu0 %v263
    %924 = vmatprep.subr.mxu0 0.0
    %925 = vmatpush1.msra.mxu0 %v262
    %926 = vmatprep.subr.mxu0 0.0
    %927 = vmatpush1.msra.mxu0 %v261
    %928 = vmatprep.subr.mxu0 0.0
    %929 = vmatpush1.msra.mxu0 %v260
    %930 = vmatprep.subr.mxu0 0.0
    %931 = vmatpush1.msra.mxu0 %v259
    %932 = vmatprep.subr.mxu0 0.0
    %933 = vmatpush1.msra.mxu0 %v258
    %934 = vmatprep.subr.mxu0 0.0
    %935 = vmatpush1.msra.mxu0 %v257
    %936 = vmatprep.subr.mxu0 0.0
    %937 = vmatpush1.msra.mxu0 %v256
    %938 = vmatprep.subr.mxu0 0.0
    %939 = vmatpush1.msra.mxu0 %v255
    %940 = vmatprep.subr.mxu0 0.0
    %941 = vmatpush1.msra.mxu0 %v254
    %942 = vmatprep.subr.mxu0 0.0
    %943 = vmatpush1.msra.mxu0 %v253
    %944 = vmatprep.subr.mxu0 0.0
    %945 = vmatpush1.msra.mxu0 %v252
    %946 = vmatprep.subr.mxu0 0.0
    %947 = vmatpush1.msra.mxu0 %v251
    %948 = vmatprep.subr.mxu0 0.0
    %949 = vmatpush1.msra.mxu0 %v250
    %950 = vmatprep.subr.mxu0 0.0
    %951 = vmatpush1.msra.mxu0 %v249
    %952 = vmatprep.subr.mxu0 0.0
    %953 = vmatpush2.msra.mxu0 %v280
    %954 = vmatprep.subr.mxu0 0.0
    %955 = vmatpush2.msra.mxu0 %v279
    %956 = vmatprep.subr.mxu0 0.0
    %957 = vmatpush2.msra.mxu0 %v278
    %958 = vmatprep.subr.mxu0 0.0
    %959 = vmatpush2.msra.mxu0 %v277
    %960 = vmatprep.subr.mxu0 0.0
    %961 = vmatpush2.msra.mxu0 %v276
    %962 = vmatprep.subr.mxu0 0.0
    %963 = vmatpush2.msra.mxu0 %v275
    %964 = vmatprep.subr.mxu0 0.0
    %965 = vmatpush2.msra.mxu0 %v274
    %966 = vmatprep.subr.mxu0 0.0
    %967 = vmatpush2.msra.mxu0 %v273
    %968 = vmatprep.subr.mxu0 0.0
    %969 = vmatpush2.msra.mxu0 %v272
    %970 = vmatprep.subr.mxu0 0.0
    %971 = vmatpush2.msra.mxu0 %v271
    %972 = vmatprep.subr.mxu0 0.0
    %973 = vmatpush2.msra.mxu0 %v270
    %974 = vmatprep.subr.mxu0 0.0
    %975 = vmatpush2.msra.mxu0 %v269
    %976 = vmatprep.subr.mxu0 0.0
    %977 = vmatpush2.msra.mxu0 %v268
    %978 = vmatprep.subr.mxu0 0.0
    %979 = vmatpush2.msra.mxu0 %v267
    %980 = vmatprep.subr.mxu0 0.0
    %981 = vmatpush2.msra.mxu0 %v266
    %982 = vmatprep.subr.mxu0 0.0
    %983 = vmatpush2.msra.mxu0 %v265
    %984 = vmatprep.mubr.f32.mxu0 %v32
    %985 = vmatmul.mubr.f32.gmra.mxu0 %v31
    %v986 = vpop.f32.mrf.mxu0
    %v987 = vadd.f32 %v902, %v986
    %v988 = vpop.f32.mrf.mxu0
    %989 = vmatprep.mubr.f32.mxu0 %v64
    %990 = vmatmul.mubr.f32.gmra.mxu0 %v63
    %v991 = vpop.f32.mrf.mxu0
    %v992 = vadd.f32 %v907, %v991
    %v993 = vpop.f32.mrf.mxu0
    %994 = vmatprep.mubr.f32.mxu0 %v96
    %995 = vmatmul.mubr.f32.gmra.mxu0 %v95
    %v996 = vpop.f32.mrf.mxu0
    %v997 = vadd.f32 %v912, %v996
    %v998 = vpop.f32.mrf.mxu0
    %999 = vmatprep.mubr.f32.mxu0 %v128
    %1000 = vmatmul.mubr.f32.gmra.mxu0 %v127
    %v1001 = vpop.f32.mrf.mxu0
    %v1002 = vadd.f32 %v917, %v1001
    %v1003 = vpop.f32.mrf.mxu0
    %1004 = vdwg.mxu0
    %1005 = vmatprep.subr.mxu0 0.0
    %1006 = vmatpush1.msra.mxu0 %v296
    %1007 = vmatprep.subr.mxu0 0.0
    %1008 = vmatpush1.msra.mxu0 %v295
    %1009 = vmatprep.subr.mxu0 0.0
    %1010 = vmatpush1.msra.mxu0 %v294
    %1011 = vmatprep.subr.mxu0 0.0
    %1012 = vmatpush1.msra.mxu0 %v293
    %1013 = vmatprep.subr.mxu0 0.0
    %1014 = vmatpush1.msra.mxu0 %v292
    %1015 = vmatprep.subr.mxu0 0.0
    %1016 = vmatpush1.msra.mxu0 %v291
    %1017 = vmatprep.subr.mxu0 0.0
    %1018 = vmatpush1.msra.mxu0 %v290
    %1019 = vmatprep.subr.mxu0 0.0
    %1020 = vmatpush1.msra.mxu0 %v289
    %1021 = vmatprep.subr.mxu0 0.0
    %1022 = vmatpush1.msra.mxu0 %v288
    %1023 = vmatprep.subr.mxu0 0.0
    %1024 = vmatpush1.msra.mxu0 %v287
    %1025 = vmatprep.subr.mxu0 0.0
    %1026 = vmatpush1.msra.mxu0 %v286
    %1027 = vmatprep.subr.mxu0 0.0
    %1028 = vmatpush1.msra.mxu0 %v285
    %1029 = vmatprep.subr.mxu0 0.0
    %1030 = vmatpush1.msra.mxu0 %v284
    %1031 = vmatprep.subr.mxu0 0.0
    %1032 = vmatpush1.msra.mxu0 %v283
    %1033 = vmatprep.subr.mxu0 0.0
    %1034 = vmatpush1.msra.mxu0 %v282
    %1035 = vmatprep.subr.mxu0 0.0
    %1036 = vmatpush1.msra.mxu0 %v281
    %1037 = vmatprep.subr.mxu0 0.0
    %1038 = vmatpush2.msra.mxu0 %v312
    %1039 = vmatprep.subr.mxu0 0.0
    %1040 = vmatpush2.msra.mxu0 %v311
    %1041 = vmatprep.subr.mxu0 0.0
    %1042 = vmatpush2.msra.mxu0 %v310
    %1043 = vmatprep.subr.mxu0 0.0
    %1044 = vmatpush2.msra.mxu0 %v309
    %1045 = vmatprep.subr.mxu0 0.0
    %1046 = vmatpush2.msra.mxu0 %v308
    %1047 = vmatprep.subr.mxu0 0.0
    %1048 = vmatpush2.msra.mxu0 %v307
    %1049 = vmatprep.subr.mxu0 0.0
    %1050 = vmatpush2.msra.mxu0 %v306
    %1051 = vmatprep.subr.mxu0 0.0
    %1052 = vmatpush2.msra.mxu0 %v305
    %1053 = vmatprep.subr.mxu0 0.0
    %1054 = vmatpush2.msra.mxu0 %v304
    %1055 = vmatprep.subr.mxu0 0.0
    %1056 = vmatpush2.msra.mxu0 %v303
    %1057 = vmatprep.subr.mxu0 0.0
    %1058 = vmatpush2.msra.mxu0 %v302
    %1059 = vmatprep.subr.mxu0 0.0
    %1060 = vmatpush2.msra.mxu0 %v301
    %1061 = vmatprep.subr.mxu0 0.0
    %1062 = vmatpush2.msra.mxu0 %v300
    %1063 = vmatprep.subr.mxu0 0.0
    %1064 = vmatpush2.msra.mxu0 %v299
    %1065 = vmatprep.subr.mxu0 0.0
    %1066 = vmatpush2.msra.mxu0 %v298
    %1067 = vmatprep.subr.mxu0 0.0
    %1068 = vmatpush2.msra.mxu0 %v297
    %1069 = vmatprep.mubr.f32.mxu0 %v34
    %1070 = vmatmul.mubr.f32.gmra.mxu0 %v33
    %v1071 = vpop.f32.mrf.mxu0
    %v1072 = vadd.f32 %v987, %v1071
    %v1073 = vpop.f32.mrf.mxu0
    %1074 = vmatprep.mubr.f32.mxu0 %v66
    %1075 = vmatmul.mubr.f32.gmra.mxu0 %v65
    %v1076 = vpop.f32.mrf.mxu0
    %v1077 = vadd.f32 %v992, %v1076
    %v1078 = vpop.f32.mrf.mxu0
    %1079 = vmatprep.mubr.f32.mxu0 %v98
    %1080 = vmatmul.mubr.f32.gmra.mxu0 %v97
    %v1081 = vpop.f32.mrf.mxu0
    %v1082 = vadd.f32 %v997, %v1081
    %v1083 = vpop.f32.mrf.mxu0
    %1084 = vmatprep.mubr.f32.mxu0 %v130
    %1085 = vmatmul.mubr.f32.gmra.mxu0 %v129
    %v1086 = vpop.f32.mrf.mxu0
    %v1087 = vadd.f32 %v1002, %v1086
    %v1088 = vpop.f32.mrf.mxu0
    %1089 = vdwg.mxu0
    %1090 = vmatprep.subr.mxu0 0.0
    %1091 = vmatpush1.msra.mxu0 %v328
    %1092 = vmatprep.subr.mxu0 0.0
    %1093 = vmatpush1.msra.mxu0 %v327
    %1094 = vmatprep.subr.mxu0 0.0
    %1095 = vmatpush1.msra.mxu0 %v326
    %1096 = vmatprep.subr.mxu0 0.0
    %1097 = vmatpush1.msra.mxu0 %v325
    %1098 = vmatprep.subr.mxu0 0.0
    %1099 = vmatpush1.msra.mxu0 %v324
    %1100 = vmatprep.subr.mxu0 0.0
    %1101 = vmatpush1.msra.mxu0 %v323
    %1102 = vmatprep.subr.mxu0 0.0
    %1103 = vmatpush1.msra.mxu0 %v322
    %1104 = vmatprep.subr.mxu0 0.0
    %1105 = vmatpush1.msra.mxu0 %v321
    %1106 = vmatprep.subr.mxu0 0.0
    %1107 = vmatpush1.msra.mxu0 %v320
    %1108 = vmatprep.subr.mxu0 0.0
    %1109 = vmatpush1.msra.mxu0 %v319
    %1110 = vmatprep.subr.mxu0 0.0
    %1111 = vmatpush1.msra.mxu0 %v318
    %1112 = vmatprep.subr.mxu0 0.0
    %1113 = vmatpush1.msra.mxu0 %v317
    %1114 = vmatprep.subr.mxu0 0.0
    %1115 = vmatpush1.msra.mxu0 %v316
    %1116 = vmatprep.subr.mxu0 0.0
    %1117 = vmatpush1.msra.mxu0 %v315
    %1118 = vmatprep.subr.mxu0 0.0
    %1119 = vmatpush1.msra.mxu0 %v314
    %1120 = vmatprep.subr.mxu0 0.0
    %1121 = vmatpush1.msra.mxu0 %v313
    %1122 = vmatprep.subr.mxu0 0.0
    %1123 = vmatpush2.msra.mxu0 %v344
    %1124 = vmatprep.subr.mxu0 0.0
    %1125 = vmatpush2.msra.mxu0 %v343
    %1126 = vmatprep.subr.mxu0 0.0
    %1127 = vmatpush2.msra.mxu0 %v342
    %1128 = vmatprep.subr.mxu0 0.0
    %1129 = vmatpush2.msra.mxu0 %v341
    %1130 = vmatprep.subr.mxu0 0.0
    %1131 = vmatpush2.msra.mxu0 %v340
    %1132 = vmatprep.subr.mxu0 0.0
    %1133 = vmatpush2.msra.mxu0 %v339
    %1134 = vmatprep.subr.mxu0 0.0
    %1135 = vmatpush2.msra.mxu0 %v338
    %1136 = vmatprep.subr.mxu0 0.0
    %1137 = vmatpush2.msra.mxu0 %v337
    %1138 = vmatprep.subr.mxu0 0.0
    %1139 = vmatpush2.msra.mxu0 %v336
    %1140 = vmatprep.subr.mxu0 0.0
    %1141 = vmatpush2.msra.mxu0 %v335
    %1142 = vmatprep.subr.mxu0 0.0
    %1143 = vmatpush2.msra.mxu0 %v334
    %1144 = vmatprep.subr.mxu0 0.0
    %1145 = vmatpush2.msra.mxu0 %v333
    %1146 = vmatprep.subr.mxu0 0.0
    %1147 = vmatpush2.msra.mxu0 %v332
    %1148 = vmatprep.subr.mxu0 0.0
    %1149 = vmatpush2.msra.mxu0 %v331
    %1150 = vmatprep.subr.mxu0 0.0
    %1151 = vmatpush2.msra.mxu0 %v330
    %1152 = vmatprep.subr.mxu0 0.0
    %1153 = vmatpush2.msra.mxu0 %v329
    %1154 = vmatprep.mubr.f32.mxu0 %v36
    %1155 = vmatmul.mubr.f32.gmra.mxu0 %v35
    %v1156 = vpop.f32.mrf.mxu0
    %v1157 = vadd.f32 %v1072, %v1156
    %v1158 = vpop.f32.mrf.mxu0
    %1159 = vmatprep.mubr.f32.mxu0 %v68
    %1160 = vmatmul.mubr.f32.gmra.mxu0 %v67
    %v1161 = vpop.f32.mrf.mxu0
    %v1162 = vadd.f32 %v1077, %v1161
    %v1163 = vpop.f32.mrf.mxu0
    %1164 = vmatprep.mubr.f32.mxu0 %v100
    %1165 = vmatmul.mubr.f32.gmra.mxu0 %v99
    %v1166 = vpop.f32.mrf.mxu0
    %v1167 = vadd.f32 %v1082, %v1166
    %v1168 = vpop.f32.mrf.mxu0
    %1169 = vmatprep.mubr.f32.mxu0 %v132
    %1170 = vmatmul.mubr.f32.gmra.mxu0 %v131
    %v1171 = vpop.f32.mrf.mxu0
    %v1172 = vadd.f32 %v1087, %v1171
    %v1173 = vpop.f32.mrf.mxu0
    %1174 = vdwg.mxu0
    %1175 = vmatprep.subr.mxu0 0.0
    %1176 = vmatpush1.msra.mxu0 %v360
    %1177 = vmatprep.subr.mxu0 0.0
    %1178 = vmatpush1.msra.mxu0 %v359
    %1179 = vmatprep.subr.mxu0 0.0
    %1180 = vmatpush1.msra.mxu0 %v358
    %1181 = vmatprep.subr.mxu0 0.0
    %1182 = vmatpush1.msra.mxu0 %v357
    %1183 = vmatprep.subr.mxu0 0.0
    %1184 = vmatpush1.msra.mxu0 %v356
    %1185 = vmatprep.subr.mxu0 0.0
    %1186 = vmatpush1.msra.mxu0 %v355
    %1187 = vmatprep.subr.mxu0 0.0
    %1188 = vmatpush1.msra.mxu0 %v354
    %1189 = vmatprep.subr.mxu0 0.0
    %1190 = vmatpush1.msra.mxu0 %v353
    %1191 = vmatprep.subr.mxu0 0.0
    %1192 = vmatpush1.msra.mxu0 %v352
    %1193 = vmatprep.subr.mxu0 0.0
    %1194 = vmatpush1.msra.mxu0 %v351
    %1195 = vmatprep.subr.mxu0 0.0
    %1196 = vmatpush1.msra.mxu0 %v350
    %1197 = vmatprep.subr.mxu0 0.0
    %1198 = vmatpush1.msra.mxu0 %v349
    %1199 = vmatprep.subr.mxu0 0.0
    %1200 = vmatpush1.msra.mxu0 %v348
    %1201 = vmatprep.subr.mxu0 0.0
    %1202 = vmatpush1.msra.mxu0 %v347
    %1203 = vmatprep.subr.mxu0 0.0
    %1204 = vmatpush1.msra.mxu0 %v346
    %1205 = vmatprep.subr.mxu0 0.0
    %1206 = vmatpush1.msra.mxu0 %v345
    %1207 = vmatprep.subr.mxu0 0.0
    %1208 = vmatpush2.msra.mxu0 %v376
    %1209 = vmatprep.subr.mxu0 0.0
    %1210 = vmatpush2.msra.mxu0 %v375
    %1211 = vmatprep.subr.mxu0 0.0
    %1212 = vmatpush2.msra.mxu0 %v374
    %1213 = vmatprep.subr.mxu0 0.0
    %1214 = vmatpush2.msra.mxu0 %v373
    %1215 = vmatprep.subr.mxu0 0.0
    %1216 = vmatpush2.msra.mxu0 %v372
    %1217 = vmatprep.subr.mxu0 0.0
    %1218 = vmatpush2.msra.mxu0 %v371
    %1219 = vmatprep.subr.mxu0 0.0
    %1220 = vmatpush2.msra.mxu0 %v370
    %1221 = vmatprep.subr.mxu0 0.0
    %1222 = vmatpush2.msra.mxu0 %v369
    %1223 = vmatprep.subr.mxu0 0.0
    %1224 = vmatpush2.msra.mxu0 %v368
    %1225 = vmatprep.subr.mxu0 0.0
    %1226 = vmatpush2.msra.mxu0 %v367
    %1227 = vmatprep.subr.mxu0 0.0
    %1228 = vmatpush2.msra.mxu0 %v366
    %1229 = vmatprep.subr.mxu0 0.0
    %1230 = vmatpush2.msra.mxu0 %v365
    %1231 = vmatprep.subr.mxu0 0.0
    %1232 = vmatpush2.msra.mxu0 %v364
    %1233 = vmatprep.subr.mxu0 0.0
    %1234 = vmatpush2.msra.mxu0 %v363
    %1235 = vmatprep.subr.mxu0 0.0
    %1236 = vmatpush2.msra.mxu0 %v362
    %1237 = vmatprep.subr.mxu0 0.0
    %1238 = vmatpush2.msra.mxu0 %v361
    %1239 = vmatprep.mubr.f32.mxu0 %v38
    %1240 = vmatmul.mubr.f32.gmra.mxu0 %v37
    %v1241 = vpop.f32.mrf.mxu0
    %v1242 = vadd.f32 %v1157, %v1241
    %v1243 = vpop.f32.mrf.mxu0
    %1244 = vmatprep.mubr.f32.mxu0 %v70
    %1245 = vmatmul.mubr.f32.gmra.mxu0 %v69
    %v1246 = vpop.f32.mrf.mxu0
    %v1247 = vadd.f32 %v1162, %v1246
    %v1248 = vpop.f32.mrf.mxu0
    %1249 = vmatprep.mubr.f32.mxu0 %v102
    %1250 = vmatmul.mubr.f32.gmra.mxu0 %v101
    %v1251 = vpop.f32.mrf.mxu0
    %v1252 = vadd.f32 %v1167, %v1251
    %v1253 = vpop.f32.mrf.mxu0
    %1254 = vmatprep.mubr.f32.mxu0 %v134
    %1255 = vmatmul.mubr.f32.gmra.mxu0 %v133
    %v1256 = vpop.f32.mrf.mxu0
    %v1257 = vadd.f32 %v1172, %v1256
    %v1258 = vpop.f32.mrf.mxu0
    %1259 = vdwg.mxu0
    %1260 = vmatprep.subr.mxu0 0.0
    %1261 = vmatpush1.msra.mxu0 %v392
    %1262 = vmatprep.subr.mxu0 0.0
    %1263 = vmatpush1.msra.mxu0 %v391
    %1264 = vmatprep.subr.mxu0 0.0
    %1265 = vmatpush1.msra.mxu0 %v390
    %1266 = vmatprep.subr.mxu0 0.0
    %1267 = vmatpush1.msra.mxu0 %v389
    %1268 = vmatprep.subr.mxu0 0.0
    %1269 = vmatpush1.msra.mxu0 %v388
    %1270 = vmatprep.subr.mxu0 0.0
    %1271 = vmatpush1.msra.mxu0 %v387
    %1272 = vmatprep.subr.mxu0 0.0
    %1273 = vmatpush1.msra.mxu0 %v386
    %1274 = vmatprep.subr.mxu0 0.0
    %1275 = vmatpush1.msra.mxu0 %v385
    %1276 = vmatprep.subr.mxu0 0.0
    %1277 = vmatpush1.msra.mxu0 %v384
    %1278 = vmatprep.subr.mxu0 0.0
    %1279 = vmatpush1.msra.mxu0 %v383
    %1280 = vmatprep.subr.mxu0 0.0
    %1281 = vmatpush1.msra.mxu0 %v382
    %1282 = vmatprep.subr.mxu0 0.0
    %1283 = vmatpush1.msra.mxu0 %v381
    %1284 = vmatprep.subr.mxu0 0.0
    %1285 = vmatpush1.msra.mxu0 %v380
    %1286 = vmatprep.subr.mxu0 0.0
    %1287 = vmatpush1.msra.mxu0 %v379
    %1288 = vmatprep.subr.mxu0 0.0
    %1289 = vmatpush1.msra.mxu0 %v378
    %1290 = vmatprep.subr.mxu0 0.0
    %1291 = vmatpush1.msra.mxu0 %v377
    %1292 = vmatprep.subr.mxu0 0.0
    %1293 = vmatpush2.msra.mxu0 %v408
    %1294 = vmatprep.subr.mxu0 0.0
    %1295 = vmatpush2.msra.mxu0 %v407
    %1296 = vmatprep.subr.mxu0 0.0
    %1297 = vmatpush2.msra.mxu0 %v406
    %1298 = vmatprep.subr.mxu0 0.0
    %1299 = vmatpush2.msra.mxu0 %v405
    %1300 = vmatprep.subr.mxu0 0.0
    %1301 = vmatpush2.msra.mxu0 %v404
    %1302 = vmatprep.subr.mxu0 0.0
    %1303 = vmatpush2.msra.mxu0 %v403
    %1304 = vmatprep.subr.mxu0 0.0
    %1305 = vmatpush2.msra.mxu0 %v402
    %1306 = vmatprep.subr.mxu0 0.0
    %1307 = vmatpush2.msra.mxu0 %v401
    %1308 = vmatprep.subr.mxu0 0.0
    %1309 = vmatpush2.msra.mxu0 %v400
    %1310 = vmatprep.subr.mxu0 0.0
    %1311 = vmatpush2.msra.mxu0 %v399
    %1312 = vmatprep.subr.mxu0 0.0
    %1313 = vmatpush2.msra.mxu0 %v398
    %1314 = vmatprep.subr.mxu0 0.0
    %1315 = vmatpush2.msra.mxu0 %v397
    %1316 = vmatprep.subr.mxu0 0.0
    %1317 = vmatpush2.msra.mxu0 %v396
    %1318 = vmatprep.subr.mxu0 0.0
    %1319 = vmatpush2.msra.mxu0 %v395
    %1320 = vmatprep.subr.mxu0 0.0
    %1321 = vmatpush2.msra.mxu0 %v394
    %1322 = vmatprep.subr.mxu0 0.0
    %1323 = vmatpush2.msra.mxu0 %v393
    %1324 = vmatprep.mubr.f32.mxu0 %v40
    %1325 = vmatmul.mubr.f32.gmra.mxu0 %v39
    %v1326 = vpop.f32.mrf.mxu0
    %v1327 = vadd.f32 %v1242, %v1326
    %v1328 = vpop.f32.mrf.mxu0
    %1329 = vmatprep.mubr.f32.mxu0 %v72
    %1330 = vmatmul.mubr.f32.gmra.mxu0 %v71
    %v1331 = vpop.f32.mrf.mxu0
    %v1332 = vadd.f32 %v1247, %v1331
    %v1333 = vpop.f32.mrf.mxu0
    %1334 = vmatprep.mubr.f32.mxu0 %v104
    %1335 = vmatmul.mubr.f32.gmra.mxu0 %v103
    %v1336 = vpop.f32.mrf.mxu0
    %v1337 = vadd.f32 %v1252, %v1336
    %v1338 = vpop.f32.mrf.mxu0
    %1339 = vmatprep.mubr.f32.mxu0 %v136
    %1340 = vmatmul.mubr.f32.gmra.mxu0 %v135
    %v1341 = vpop.f32.mrf.mxu0
    %v1342 = vadd.f32 %v1257, %v1341
    %v1343 = vpop.f32.mrf.mxu0
    %1344 = vdwg.mxu0
    %1345 = vmatprep.subr.mxu0 0.0
    %1346 = vmatpush1.msra.mxu0 %v424
    %1347 = vmatprep.subr.mxu0 0.0
    %1348 = vmatpush1.msra.mxu0 %v423
    %1349 = vmatprep.subr.mxu0 0.0
    %1350 = vmatpush1.msra.mxu0 %v422
    %1351 = vmatprep.subr.mxu0 0.0
    %1352 = vmatpush1.msra.mxu0 %v421
    %1353 = vmatprep.subr.mxu0 0.0
    %1354 = vmatpush1.msra.mxu0 %v420
    %1355 = vmatprep.subr.mxu0 0.0
    %1356 = vmatpush1.msra.mxu0 %v419
    %1357 = vmatprep.subr.mxu0 0.0
    %1358 = vmatpush1.msra.mxu0 %v418
    %1359 = vmatprep.subr.mxu0 0.0
    %1360 = vmatpush1.msra.mxu0 %v417
    %1361 = vmatprep.subr.mxu0 0.0
    %1362 = vmatpush1.msra.mxu0 %v416
    %1363 = vmatprep.subr.mxu0 0.0
    %1364 = vmatpush1.msra.mxu0 %v415
    %1365 = vmatprep.subr.mxu0 0.0
    %1366 = vmatpush1.msra.mxu0 %v414
    %1367 = vmatprep.subr.mxu0 0.0
    %1368 = vmatpush1.msra.mxu0 %v413
    %1369 = vmatprep.subr.mxu0 0.0
    %1370 = vmatpush1.msra.mxu0 %v412
    %1371 = vmatprep.subr.mxu0 0.0
    %1372 = vmatpush1.msra.mxu0 %v411
    %1373 = vmatprep.subr.mxu0 0.0
    %1374 = vmatpush1.msra.mxu0 %v410
    %1375 = vmatprep.subr.mxu0 0.0
    %1376 = vmatpush1.msra.mxu0 %v409
    %1377 = vmatprep.subr.mxu0 0.0
    %1378 = vmatpush2.msra.mxu0 %v440
    %1379 = vmatprep.subr.mxu0 0.0
    %1380 = vmatpush2.msra.mxu0 %v439
    %1381 = vmatprep.subr.mxu0 0.0
    %1382 = vmatpush2.msra.mxu0 %v438
    %1383 = vmatprep.subr.mxu0 0.0
    %1384 = vmatpush2.msra.mxu0 %v437
    %1385 = vmatprep.subr.mxu0 0.0
    %1386 = vmatpush2.msra.mxu0 %v436
    %1387 = vmatprep.subr.mxu0 0.0
    %1388 = vmatpush2.msra.mxu0 %v435
    %1389 = vmatprep.subr.mxu0 0.0
    %1390 = vmatpush2.msra.mxu0 %v434
    %1391 = vmatprep.subr.mxu0 0.0
    %1392 = vmatpush2.msra.mxu0 %v433
    %1393 = vmatprep.subr.mxu0 0.0
    %1394 = vmatpush2.msra.mxu0 %v432
    %1395 = vmatprep.subr.mxu0 0.0
    %1396 = vmatpush2.msra.mxu0 %v431
    %1397 = vmatprep.subr.mxu0 0.0
    %1398 = vmatpush2.msra.mxu0 %v430
    %1399 = vmatprep.subr.mxu0 0.0
    %1400 = vmatpush2.msra.mxu0 %v429
    %1401 = vmatprep.subr.mxu0 0.0
    %1402 = vmatpush2.msra.mxu0 %v428
    %1403 = vmatprep.subr.mxu0 0.0
    %1404 = vmatpush2.msra.mxu0 %v427
    %1405 = vmatprep.subr.mxu0 0.0
    %1406 = vmatpush2.msra.mxu0 %v426
    %1407 = vmatprep.subr.mxu0 0.0
    %1408 = vmatpush2.msra.mxu0 %v425
    %1409 = vmatprep.mubr.f32.mxu0 %v42
    %1410 = vmatmul.mubr.f32.gmra.mxu0 %v41
    %v1411 = vpop.f32.mrf.mxu0
    %v1412 = vadd.f32 %v1327, %v1411
    %v1413 = vpop.f32.mrf.mxu0
    %1414 = vmatprep.mubr.f32.mxu0 %v74
    %1415 = vmatmul.mubr.f32.gmra.mxu0 %v73
    %v1416 = vpop.f32.mrf.mxu0
    %v1417 = vadd.f32 %v1332, %v1416
    %v1418 = vpop.f32.mrf.mxu0
    %1419 = vmatprep.mubr.f32.mxu0 %v106
    %1420 = vmatmul.mubr.f32.gmra.mxu0 %v105
    %v1421 = vpop.f32.mrf.mxu0
    %v1422 = vadd.f32 %v1337, %v1421
    %v1423 = vpop.f32.mrf.mxu0
    %1424 = vmatprep.mubr.f32.mxu0 %v138
    %1425 = vmatmul.mubr.f32.gmra.mxu0 %v137
    %v1426 = vpop.f32.mrf.mxu0
    %v1427 = vadd.f32 %v1342, %v1426
    %v1428 = vpop.f32.mrf.mxu0
    %1429 = vdwg.mxu0
    %1430 = vmatprep.subr.mxu0 0.0
    %1431 = vmatpush1.msra.mxu0 %v456
    %1432 = vmatprep.subr.mxu0 0.0
    %1433 = vmatpush1.msra.mxu0 %v455
    %1434 = vmatprep.subr.mxu0 0.0
    %1435 = vmatpush1.msra.mxu0 %v454
    %1436 = vmatprep.subr.mxu0 0.0
    %1437 = vmatpush1.msra.mxu0 %v453
    %1438 = vmatprep.subr.mxu0 0.0
    %1439 = vmatpush1.msra.mxu0 %v452
    %1440 = vmatprep.subr.mxu0 0.0
    %1441 = vmatpush1.msra.mxu0 %v451
    %1442 = vmatprep.subr.mxu0 0.0
    %1443 = vmatpush1.msra.mxu0 %v450
    %1444 = vmatprep.subr.mxu0 0.0
    %1445 = vmatpush1.msra.mxu0 %v449
    %1446 = vmatprep.subr.mxu0 0.0
    %1447 = vmatpush1.msra.mxu0 %v448
    %1448 = vmatprep.subr.mxu0 0.0
    %1449 = vmatpush1.msra.mxu0 %v447
    %1450 = vmatprep.subr.mxu0 0.0
    %1451 = vmatpush1.msra.mxu0 %v446
    %1452 = vmatprep.subr.mxu0 0.0
    %1453 = vmatpush1.msra.mxu0 %v445
    %1454 = vmatprep.subr.mxu0 0.0
    %1455 = vmatpush1.msra.mxu0 %v444
    %1456 = vmatprep.subr.mxu0 0.0
    %1457 = vmatpush1.msra.mxu0 %v443
    %1458 = vmatprep.subr.mxu0 0.0
    %1459 = vmatpush1.msra.mxu0 %v442
    %1460 = vmatprep.subr.mxu0 0.0
    %1461 = vmatpush1.msra.mxu0 %v441
    %1462 = vmatprep.subr.mxu0 0.0
    %1463 = vmatpush2.msra.mxu0 %v472
    %1464 = vmatprep.subr.mxu0 0.0
    %1465 = vmatpush2.msra.mxu0 %v471
    %1466 = vmatprep.subr.mxu0 0.0
    %1467 = vmatpush2.msra.mxu0 %v470
    %1468 = vmatprep.subr.mxu0 0.0
    %1469 = vmatpush2.msra.mxu0 %v469
    %1470 = vmatprep.subr.mxu0 0.0
    %1471 = vmatpush2.msra.mxu0 %v468
    %1472 = vmatprep.subr.mxu0 0.0
    %1473 = vmatpush2.msra.mxu0 %v467
    %1474 = vmatprep.subr.mxu0 0.0
    %1475 = vmatpush2.msra.mxu0 %v466
    %1476 = vmatprep.subr.mxu0 0.0
    %1477 = vmatpush2.msra.mxu0 %v465
    %1478 = vmatprep.subr.mxu0 0.0
    %1479 = vmatpush2.msra.mxu0 %v464
    %1480 = vmatprep.subr.mxu0 0.0
    %1481 = vmatpush2.msra.mxu0 %v463
    %1482 = vmatprep.subr.mxu0 0.0
    %1483 = vmatpush2.msra.mxu0 %v462
    %1484 = vmatprep.subr.mxu0 0.0
    %1485 = vmatpush2.msra.mxu0 %v461
    %1486 = vmatprep.subr.mxu0 0.0
    %1487 = vmatpush2.msra.mxu0 %v460
    %1488 = vmatprep.subr.mxu0 0.0
    %1489 = vmatpush2.msra.mxu0 %v459
    %1490 = vmatprep.subr.mxu0 0.0
    %1491 = vmatpush2.msra.mxu0 %v458
    %1492 = vmatprep.subr.mxu0 0.0
    %1493 = vmatpush2.msra.mxu0 %v457
    %1494 = vmatprep.mubr.f32.mxu0 %v44
    %1495 = vmatmul.mubr.f32.gmra.mxu0 %v43
    %v1496 = vpop.f32.mrf.mxu0
    %v1497 = vadd.f32 %v1412, %v1496
    %v1498 = vpop.f32.mrf.mxu0
    %1499 = vmatprep.mubr.f32.mxu0 %v76
    %1500 = vmatmul.mubr.f32.gmra.mxu0 %v75
    %v1501 = vpop.f32.mrf.mxu0
    %v1502 = vadd.f32 %v1417, %v1501
    %v1503 = vpop.f32.mrf.mxu0
    %1504 = vmatprep.mubr.f32.mxu0 %v108
    %1505 = vmatmul.mubr.f32.gmra.mxu0 %v107
    %v1506 = vpop.f32.mrf.mxu0
    %v1507 = vadd.f32 %v1422, %v1506
    %v1508 = vpop.f32.mrf.mxu0
    %1509 = vmatprep.mubr.f32.mxu0 %v140
    %1510 = vmatmul.mubr.f32.gmra.mxu0 %v139
    %v1511 = vpop.f32.mrf.mxu0
    %v1512 = vadd.f32 %v1427, %v1511
    %v1513 = vpop.f32.mrf.mxu0
    %1514 = vdwg.mxu0
    %1515 = vmatprep.subr.mxu0 0.0
    %1516 = vmatpush1.msra.mxu0 %v488
    %1517 = vmatprep.subr.mxu0 0.0
    %1518 = vmatpush1.msra.mxu0 %v487
    %1519 = vmatprep.subr.mxu0 0.0
    %1520 = vmatpush1.msra.mxu0 %v486
    %1521 = vmatprep.subr.mxu0 0.0
    %1522 = vmatpush1.msra.mxu0 %v485
    %1523 = vmatprep.subr.mxu0 0.0
    %1524 = vmatpush1.msra.mxu0 %v484
    %1525 = vmatprep.subr.mxu0 0.0
    %1526 = vmatpush1.msra.mxu0 %v483
    %1527 = vmatprep.subr.mxu0 0.0
    %1528 = vmatpush1.msra.mxu0 %v482
    %1529 = vmatprep.subr.mxu0 0.0
    %1530 = vmatpush1.msra.mxu0 %v481
    %1531 = vmatprep.subr.mxu0 0.0
    %1532 = vmatpush1.msra.mxu0 %v480
    %1533 = vmatprep.subr.mxu0 0.0
    %1534 = vmatpush1.msra.mxu0 %v479
    %1535 = vmatprep.subr.mxu0 0.0
    %1536 = vmatpush1.msra.mxu0 %v478
    %1537 = vmatprep.subr.mxu0 0.0
    %1538 = vmatpush1.msra.mxu0 %v477
    %1539 = vmatprep.subr.mxu0 0.0
    %1540 = vmatpush1.msra.mxu0 %v476
    %1541 = vmatprep.subr.mxu0 0.0
    %1542 = vmatpush1.msra.mxu0 %v475
    %1543 = vmatprep.subr.mxu0 0.0
    %1544 = vmatpush1.msra.mxu0 %v474
    %1545 = vmatprep.subr.mxu0 0.0
    %1546 = vmatpush1.msra.mxu0 %v473
    %1547 = vmatprep.subr.mxu0 0.0
    %1548 = vmatpush2.msra.mxu0 %v504
    %1549 = vmatprep.subr.mxu0 0.0
    %1550 = vmatpush2.msra.mxu0 %v503
    %1551 = vmatprep.subr.mxu0 0.0
    %1552 = vmatpush2.msra.mxu0 %v502
    %1553 = vmatprep.subr.mxu0 0.0
    %1554 = vmatpush2.msra.mxu0 %v501
    %1555 = vmatprep.subr.mxu0 0.0
    %1556 = vmatpush2.msra.mxu0 %v500
    %1557 = vmatprep.subr.mxu0 0.0
    %1558 = vmatpush2.msra.mxu0 %v499
    %1559 = vmatprep.subr.mxu0 0.0
    %1560 = vmatpush2.msra.mxu0 %v498
    %1561 = vmatprep.subr.mxu0 0.0
    %1562 = vmatpush2.msra.mxu0 %v497
    %1563 = vmatprep.subr.mxu0 0.0
    %1564 = vmatpush2.msra.mxu0 %v496
    %1565 = vmatprep.subr.mxu0 0.0
    %1566 = vmatpush2.msra.mxu0 %v495
    %1567 = vmatprep.subr.mxu0 0.0
    %1568 = vmatpush2.msra.mxu0 %v494
    %1569 = vmatprep.subr.mxu0 0.0
    %1570 = vmatpush2.msra.mxu0 %v493
    %1571 = vmatprep.subr.mxu0 0.0
    %1572 = vmatpush2.msra.mxu0 %v492
    %1573 = vmatprep.subr.mxu0 0.0
    %1574 = vmatpush2.msra.mxu0 %v491
    %1575 = vmatprep.subr.mxu0 0.0
    %1576 = vmatpush2.msra.mxu0 %v490
    %1577 = vmatprep.subr.mxu0 0.0
    %1578 = vmatpush2.msra.mxu0 %v489
    %1579 = vmatprep.mubr.f32.mxu0 %v46
    %1580 = vmatmul.mubr.f32.gmra.mxu0 %v45
    %v1581 = vpop.f32.mrf.mxu0
    %v1582 = vadd.f32 %v1497, %v1581
    %v1583 = vpop.f32.mrf.mxu0
    %1584 = vmatprep.mubr.f32.mxu0 %v78
    %1585 = vmatmul.mubr.f32.gmra.mxu0 %v77
    %v1586 = vpop.f32.mrf.mxu0
    %v1587 = vadd.f32 %v1502, %v1586
    %v1588 = vpop.f32.mrf.mxu0
    %1589 = vmatprep.mubr.f32.mxu0 %v110
    %1590 = vmatmul.mubr.f32.gmra.mxu0 %v109
    %v1591 = vpop.f32.mrf.mxu0
    %v1592 = vadd.f32 %v1507, %v1591
    %v1593 = vpop.f32.mrf.mxu0
    %1594 = vmatprep.mubr.f32.mxu0 %v142
    %1595 = vmatmul.mubr.f32.gmra.mxu0 %v141
    %v1596 = vpop.f32.mrf.mxu0
    %v1597 = vadd.f32 %v1512, %v1596
    %v1598 = vpop.f32.mrf.mxu0
    %1599 = vdwg.mxu0
    %1600 = vmatprep.subr.mxu0 0.0
    %1601 = vmatpush1.msra.mxu0 %v520
    %1602 = vmatprep.subr.mxu0 0.0
    %1603 = vmatpush1.msra.mxu0 %v519
    %1604 = vmatprep.subr.mxu0 0.0
    %1605 = vmatpush1.msra.mxu0 %v518
    %1606 = vmatprep.subr.mxu0 0.0
    %1607 = vmatpush1.msra.mxu0 %v517
    %1608 = vmatprep.subr.mxu0 0.0
    %1609 = vmatpush1.msra.mxu0 %v516
    %1610 = vmatprep.subr.mxu0 0.0
    %1611 = vmatpush1.msra.mxu0 %v515
    %1612 = vmatprep.subr.mxu0 0.0
    %1613 = vmatpush1.msra.mxu0 %v514
    %1614 = vmatprep.subr.mxu0 0.0
    %1615 = vmatpush1.msra.mxu0 %v513
    %1616 = vmatprep.subr.mxu0 0.0
    %1617 = vmatpush1.msra.mxu0 %v512
    %1618 = vmatprep.subr.mxu0 0.0
    %1619 = vmatpush1.msra.mxu0 %v511
    %1620 = vmatprep.subr.mxu0 0.0
    %1621 = vmatpush1.msra.mxu0 %v510
    %1622 = vmatprep.subr.mxu0 0.0
    %1623 = vmatpush1.msra.mxu0 %v509
    %1624 = vmatprep.subr.mxu0 0.0
    %1625 = vmatpush1.msra.mxu0 %v508
    %1626 = vmatprep.subr.mxu0 0.0
    %1627 = vmatpush1.msra.mxu0 %v507
    %1628 = vmatprep.subr.mxu0 0.0
    %1629 = vmatpush1.msra.mxu0 %v506
    %1630 = vmatprep.subr.mxu0 0.0
    %1631 = vmatpush1.msra.mxu0 %v505
    %1632 = vmatprep.subr.mxu0 0.0
    %1633 = vmatpush2.msra.mxu0 %v536
    %1634 = vmatprep.subr.mxu0 0.0
    %1635 = vmatpush2.msra.mxu0 %v535
    %1636 = vmatprep.subr.mxu0 0.0
    %1637 = vmatpush2.msra.mxu0 %v534
    %1638 = vmatprep.subr.mxu0 0.0
    %1639 = vmatpush2.msra.mxu0 %v533
    %1640 = vmatprep.subr.mxu0 0.0
    %1641 = vmatpush2.msra.mxu0 %v532
    %1642 = vmatprep.subr.mxu0 0.0
    %1643 = vmatpush2.msra.mxu0 %v531
    %1644 = vmatprep.subr.mxu0 0.0
    %1645 = vmatpush2.msra.mxu0 %v530
    %1646 = vmatprep.subr.mxu0 0.0
    %1647 = vmatpush2.msra.mxu0 %v529
    %1648 = vmatprep.subr.mxu0 0.0
    %1649 = vmatpush2.msra.mxu0 %v528
    %1650 = vmatprep.subr.mxu0 0.0
    %1651 = vmatpush2.msra.mxu0 %v527
    %1652 = vmatprep.subr.mxu0 0.0
    %1653 = vmatpush2.msra.mxu0 %v526
    %1654 = vmatprep.subr.mxu0 0.0
    %1655 = vmatpush2.msra.mxu0 %v525
    %1656 = vmatprep.subr.mxu0 0.0
    %1657 = vmatpush2.msra.mxu0 %v524
    %1658 = vmatprep.subr.mxu0 0.0
    %1659 = vmatpush2.msra.mxu0 %v523
    %1660 = vmatprep.subr.mxu0 0.0
    %1661 = vmatpush2.msra.mxu0 %v522
    %1662 = vmatprep.subr.mxu0 0.0
    %1663 = vmatpush2.msra.mxu0 %v521
    %1664 = vmatprep.mubr.f32.mxu0 %v48
    %1665 = vmatmul.mubr.f32.gmra.mxu0 %v47
    %v1666 = vpop.f32.mrf.mxu0
    %v1667 = vadd.f32 %v1582, %v1666
    %v1668 = vpop.f32.mrf.mxu0
    %1669 = vmatprep.mubr.f32.mxu0 %v80
    %1670 = vmatmul.mubr.f32.gmra.mxu0 %v79
    %v1671 = vpop.f32.mrf.mxu0
    %v1672 = vadd.f32 %v1587, %v1671
    %v1673 = vpop.f32.mrf.mxu0
    %1674 = vmatprep.mubr.f32.mxu0 %v112
    %1675 = vmatmul.mubr.f32.gmra.mxu0 %v111
    %v1676 = vpop.f32.mrf.mxu0
    %v1677 = vadd.f32 %v1592, %v1676
    %v1678 = vpop.f32.mrf.mxu0
    %1679 = vmatprep.mubr.f32.mxu0 %v144
    %1680 = vmatmul.mubr.f32.gmra.mxu0 %v143
    %v1681 = vpop.f32.mrf.mxu0
    %v1682 = vadd.f32 %v1597, %v1681
    %v1683 = vpop.f32.mrf.mxu0
    %1684 = vdwg.mxu0
    %1685 = vmatprep.subr.mxu0 0.0
    %1686 = vmatpush1.msra.mxu0 %v552
    %1687 = vmatprep.subr.mxu0 0.0
    %1688 = vmatpush1.msra.mxu0 %v551
    %1689 = vmatprep.subr.mxu0 0.0
    %1690 = vmatpush1.msra.mxu0 %v550
    %1691 = vmatprep.subr.mxu0 0.0
    %1692 = vmatpush1.msra.mxu0 %v549
    %1693 = vmatprep.subr.mxu0 0.0
    %1694 = vmatpush1.msra.mxu0 %v548
    %1695 = vmatprep.subr.mxu0 0.0
    %1696 = vmatpush1.msra.mxu0 %v547
    %1697 = vmatprep.subr.mxu0 0.0
    %1698 = vmatpush1.msra.mxu0 %v546
    %1699 = vmatprep.subr.mxu0 0.0
    %1700 = vmatpush1.msra.mxu0 %v545
    %1701 = vmatprep.subr.mxu0 0.0
    %1702 = vmatpush1.msra.mxu0 %v544
    %1703 = vmatprep.subr.mxu0 0.0
    %1704 = vmatpush1.msra.mxu0 %v543
    %1705 = vmatprep.subr.mxu0 0.0
    %1706 = vmatpush1.msra.mxu0 %v542
    %1707 = vmatprep.subr.mxu0 0.0
    %1708 = vmatpush1.msra.mxu0 %v541
    %1709 = vmatprep.subr.mxu0 0.0
    %1710 = vmatpush1.msra.mxu0 %v540
    %1711 = vmatprep.subr.mxu0 0.0
    %1712 = vmatpush1.msra.mxu0 %v539
    %1713 = vmatprep.subr.mxu0 0.0
    %1714 = vmatpush1.msra.mxu0 %v538
    %1715 = vmatprep.subr.mxu0 0.0
    %1716 = vmatpush1.msra.mxu0 %v537
    %1717 = vmatprep.subr.mxu0 0.0
    %1718 = vmatpush2.msra.mxu0 %v568
    %1719 = vmatprep.subr.mxu0 0.0
    %1720 = vmatpush2.msra.mxu0 %v567
    %1721 = vmatprep.subr.mxu0 0.0
    %1722 = vmatpush2.msra.mxu0 %v566
    %1723 = vmatprep.subr.mxu0 0.0
    %1724 = vmatpush2.msra.mxu0 %v565
    %1725 = vmatprep.subr.mxu0 0.0
    %1726 = vmatpush2.msra.mxu0 %v564
    %1727 = vmatprep.subr.mxu0 0.0
    %1728 = vmatpush2.msra.mxu0 %v563
    %1729 = vmatprep.subr.mxu0 0.0
    %1730 = vmatpush2.msra.mxu0 %v562
    %1731 = vmatprep.subr.mxu0 0.0
    %1732 = vmatpush2.msra.mxu0 %v561
    %1733 = vmatprep.subr.mxu0 0.0
    %1734 = vmatpush2.msra.mxu0 %v560
    %1735 = vmatprep.subr.mxu0 0.0
    %1736 = vmatpush2.msra.mxu0 %v559
    %1737 = vmatprep.subr.mxu0 0.0
    %1738 = vmatpush2.msra.mxu0 %v558
    %1739 = vmatprep.subr.mxu0 0.0
    %1740 = vmatpush2.msra.mxu0 %v557
    %1741 = vmatprep.subr.mxu0 0.0
    %1742 = vmatpush2.msra.mxu0 %v556
    %1743 = vmatprep.subr.mxu0 0.0
    %1744 = vmatpush2.msra.mxu0 %v555
    %1745 = vmatprep.subr.mxu0 0.0
    %1746 = vmatpush2.msra.mxu0 %v554
    %1747 = vmatprep.subr.mxu0 0.0
    %1748 = vmatpush2.msra.mxu0 %v553
    %1749 = vmatprep.mubr.f32.mxu0 %v50
    %1750 = vmatmul.mubr.f32.gmra.mxu0 %v49
    %v1751 = vpop.f32.mrf.mxu0
    %v1752 = vadd.f32 %v1667, %v1751
    %v1753 = vpop.f32.mrf.mxu0
    %1754 = vmatprep.mubr.f32.mxu0 %v82
    %1755 = vmatmul.mubr.f32.gmra.mxu0 %v81
    %v1756 = vpop.f32.mrf.mxu0
    %v1757 = vadd.f32 %v1672, %v1756
    %v1758 = vpop.f32.mrf.mxu0
    %1759 = vmatprep.mubr.f32.mxu0 %v114
    %1760 = vmatmul.mubr.f32.gmra.mxu0 %v113
    %v1761 = vpop.f32.mrf.mxu0
    %v1762 = vadd.f32 %v1677, %v1761
    %v1763 = vpop.f32.mrf.mxu0
    %1764 = vmatprep.mubr.f32.mxu0 %v146
    %1765 = vmatmul.mubr.f32.gmra.mxu0 %v145
    %v1766 = vpop.f32.mrf.mxu0
    %v1767 = vadd.f32 %v1682, %v1766
    %v1768 = vpop.f32.mrf.mxu0
    %1769 = vdwg.mxu0
    %1770 = vmatprep.subr.mxu0 0.0
    %1771 = vmatpush1.msra.mxu0 %v584
    %1772 = vmatprep.subr.mxu0 0.0
    %1773 = vmatpush1.msra.mxu0 %v583
    %1774 = vmatprep.subr.mxu0 0.0
    %1775 = vmatpush1.msra.mxu0 %v582
    %1776 = vmatprep.subr.mxu0 0.0
    %1777 = vmatpush1.msra.mxu0 %v581
    %1778 = vmatprep.subr.mxu0 0.0
    %1779 = vmatpush1.msra.mxu0 %v580
    %1780 = vmatprep.subr.mxu0 0.0
    %1781 = vmatpush1.msra.mxu0 %v579
    %1782 = vmatprep.subr.mxu0 0.0
    %1783 = vmatpush1.msra.mxu0 %v578
    %1784 = vmatprep.subr.mxu0 0.0
    %1785 = vmatpush1.msra.mxu0 %v577
    %1786 = vmatprep.subr.mxu0 0.0
    %1787 = vmatpush1.msra.mxu0 %v576
    %1788 = vmatprep.subr.mxu0 0.0
    %1789 = vmatpush1.msra.mxu0 %v575
    %1790 = vmatprep.subr.mxu0 0.0
    %1791 = vmatpush1.msra.mxu0 %v574
    %1792 = vmatprep.subr.mxu0 0.0
    %1793 = vmatpush1.msra.mxu0 %v573
    %1794 = vmatprep.subr.mxu0 0.0
    %1795 = vmatpush1.msra.mxu0 %v572
    %1796 = vmatprep.subr.mxu0 0.0
    %1797 = vmatpush1.msra.mxu0 %v571
    %1798 = vmatprep.subr.mxu0 0.0
    %1799 = vmatpush1.msra.mxu0 %v570
    %1800 = vmatprep.subr.mxu0 0.0
    %1801 = vmatpush1.msra.mxu0 %v569
    %1802 = vmatprep.subr.mxu0 0.0
    %1803 = vmatpush2.msra.mxu0 %v600
    %1804 = vmatprep.subr.mxu0 0.0
    %1805 = vmatpush2.msra.mxu0 %v599
    %1806 = vmatprep.subr.mxu0 0.0
    %1807 = vmatpush2.msra.mxu0 %v598
    %1808 = vmatprep.subr.mxu0 0.0
    %1809 = vmatpush2.msra.mxu0 %v597
    %1810 = vmatprep.subr.mxu0 0.0
    %1811 = vmatpush2.msra.mxu0 %v596
    %1812 = vmatprep.subr.mxu0 0.0
    %1813 = vmatpush2.msra.mxu0 %v595
    %1814 = vmatprep.subr.mxu0 0.0
    %1815 = vmatpush2.msra.mxu0 %v594
    %1816 = vmatprep.subr.mxu0 0.0
    %1817 = vmatpush2.msra.mxu0 %v593
    %1818 = vmatprep.subr.mxu0 0.0
    %1819 = vmatpush2.msra.mxu0 %v592
    %1820 = vmatprep.subr.mxu0 0.0
    %1821 = vmatpush2.msra.mxu0 %v591
    %1822 = vmatprep.subr.mxu0 0.0
    %1823 = vmatpush2.msra.mxu0 %v590
    %1824 = vmatprep.subr.mxu0 0.0
    %1825 = vmatpush2.msra.mxu0 %v589
    %1826 = vmatprep.subr.mxu0 0.0
    %1827 = vmatpush2.msra.mxu0 %v588
    %1828 = vmatprep.subr.mxu0 0.0
    %1829 = vmatpush2.msra.mxu0 %v587
    %1830 = vmatprep.subr.mxu0 0.0
    %1831 = vmatpush2.msra.mxu0 %v586
    %1832 = vmatprep.subr.mxu0 0.0
    %1833 = vmatpush2.msra.mxu0 %v585
    %1834 = vmatprep.mubr.f32.mxu0 %v52
    %1835 = vmatmul.mubr.f32.gmra.mxu0 %v51
    %v1836 = vpop.f32.mrf.mxu0
    %v1837 = vadd.f32 %v1752, %v1836
    %v1838 = vpop.f32.mrf.mxu0
    %1839 = vmatprep.mubr.f32.mxu0 %v84
    %1840 = vmatmul.mubr.f32.gmra.mxu0 %v83
    %v1841 = vpop.f32.mrf.mxu0
    %v1842 = vadd.f32 %v1757, %v1841
    %v1843 = vpop.f32.mrf.mxu0
    %1844 = vmatprep.mubr.f32.mxu0 %v116
    %1845 = vmatmul.mubr.f32.gmra.mxu0 %v115
    %v1846 = vpop.f32.mrf.mxu0
    %v1847 = vadd.f32 %v1762, %v1846
    %v1848 = vpop.f32.mrf.mxu0
    %1849 = vmatprep.mubr.f32.mxu0 %v148
    %1850 = vmatmul.mubr.f32.gmra.mxu0 %v147
    %v1851 = vpop.f32.mrf.mxu0
    %v1852 = vadd.f32 %v1767, %v1851
    %v1853 = vpop.f32.mrf.mxu0
    %1854 = vdwg.mxu0
    %1855 = vmatprep.subr.mxu0 0.0
    %1856 = vmatpush1.msra.mxu0 %v616
    %1857 = vmatprep.subr.mxu0 0.0
    %1858 = vmatpush1.msra.mxu0 %v615
    %1859 = vmatprep.subr.mxu0 0.0
    %1860 = vmatpush1.msra.mxu0 %v614
    %1861 = vmatprep.subr.mxu0 0.0
    %1862 = vmatpush1.msra.mxu0 %v613
    %1863 = vmatprep.subr.mxu0 0.0
    %1864 = vmatpush1.msra.mxu0 %v612
    %1865 = vmatprep.subr.mxu0 0.0
    %1866 = vmatpush1.msra.mxu0 %v611
    %1867 = vmatprep.subr.mxu0 0.0
    %1868 = vmatpush1.msra.mxu0 %v610
    %1869 = vmatprep.subr.mxu0 0.0
    %1870 = vmatpush1.msra.mxu0 %v609
    %1871 = vmatprep.subr.mxu0 0.0
    %1872 = vmatpush1.msra.mxu0 %v608
    %1873 = vmatprep.subr.mxu0 0.0
    %1874 = vmatpush1.msra.mxu0 %v607
    %1875 = vmatprep.subr.mxu0 0.0
    %1876 = vmatpush1.msra.mxu0 %v606
    %1877 = vmatprep.subr.mxu0 0.0
    %1878 = vmatpush1.msra.mxu0 %v605
    %1879 = vmatprep.subr.mxu0 0.0
    %1880 = vmatpush1.msra.mxu0 %v604
    %1881 = vmatprep.subr.mxu0 0.0
    %1882 = vmatpush1.msra.mxu0 %v603
    %1883 = vmatprep.subr.mxu0 0.0
    %1884 = vmatpush1.msra.mxu0 %v602
    %1885 = vmatprep.subr.mxu0 0.0
    %1886 = vmatpush1.msra.mxu0 %v601
    %1887 = vmatprep.subr.mxu0 0.0
    %1888 = vmatpush2.msra.mxu0 %v632
    %1889 = vmatprep.subr.mxu0 0.0
    %1890 = vmatpush2.msra.mxu0 %v631
    %1891 = vmatprep.subr.mxu0 0.0
    %1892 = vmatpush2.msra.mxu0 %v630
    %1893 = vmatprep.subr.mxu0 0.0
    %1894 = vmatpush2.msra.mxu0 %v629
    %1895 = vmatprep.subr.mxu0 0.0
    %1896 = vmatpush2.msra.mxu0 %v628
    %1897 = vmatprep.subr.mxu0 0.0
    %1898 = vmatpush2.msra.mxu0 %v627
    %1899 = vmatprep.subr.mxu0 0.0
    %1900 = vmatpush2.msra.mxu0 %v626
    %1901 = vmatprep.subr.mxu0 0.0
    %1902 = vmatpush2.msra.mxu0 %v625
    %1903 = vmatprep.subr.mxu0 0.0
    %1904 = vmatpush2.msra.mxu0 %v624
    %1905 = vmatprep.subr.mxu0 0.0
    %1906 = vmatpush2.msra.mxu0 %v623
    %1907 = vmatprep.subr.mxu0 0.0
    %1908 = vmatpush2.msra.mxu0 %v622
    %1909 = vmatprep.subr.mxu0 0.0
    %1910 = vmatpush2.msra.mxu0 %v621
    %1911 = vmatprep.subr.mxu0 0.0
    %1912 = vmatpush2.msra.mxu0 %v620
    %1913 = vmatprep.subr.mxu0 0.0
    %1914 = vmatpush2.msra.mxu0 %v619
    %1915 = vmatprep.subr.mxu0 0.0
    %1916 = vmatpush2.msra.mxu0 %v618
    %1917 = vmatprep.subr.mxu0 0.0
    %1918 = vmatpush2.msra.mxu0 %v617
    %1919 = vmatprep.mubr.f32.mxu0 %v54
    %1920 = vmatmul.mubr.f32.gmra.mxu0 %v53
    %v1921 = vpop.f32.mrf.mxu0
    %v1922 = vadd.f32 %v1837, %v1921
    %v1923 = vpop.f32.mrf.mxu0
    %1924 = vmatprep.mubr.f32.mxu0 %v86
    %1925 = vmatmul.mubr.f32.gmra.mxu0 %v85
    %v1926 = vpop.f32.mrf.mxu0
    %v1927 = vadd.f32 %v1842, %v1926
    %v1928 = vpop.f32.mrf.mxu0
    %1929 = vmatprep.mubr.f32.mxu0 %v118
    %1930 = vmatmul.mubr.f32.gmra.mxu0 %v117
    %v1931 = vpop.f32.mrf.mxu0
    %v1932 = vadd.f32 %v1847, %v1931
    %v1933 = vpop.f32.mrf.mxu0
    %1934 = vmatprep.mubr.f32.mxu0 %v150
    %1935 = vmatmul.mubr.f32.gmra.mxu0 %v149
    %v1936 = vpop.f32.mrf.mxu0
    %v1937 = vadd.f32 %v1852, %v1936
    %v1938 = vpop.f32.mrf.mxu0
    %1939 = vdwg.mxu0
    %1940 = vmatprep.subr.mxu0 0.0
    %1941 = vmatpush1.msra.mxu0 %v648
    %1942 = vmatprep.subr.mxu0 0.0
    %1943 = vmatpush1.msra.mxu0 %v647
    %1944 = vmatprep.subr.mxu0 0.0
    %1945 = vmatpush1.msra.mxu0 %v646
    %1946 = vmatprep.subr.mxu0 0.0
    %1947 = vmatpush1.msra.mxu0 %v645
    %1948 = vmatprep.subr.mxu0 0.0
    %1949 = vmatpush1.msra.mxu0 %v644
    %1950 = vmatprep.subr.mxu0 0.0
    %1951 = vmatpush1.msra.mxu0 %v643
    %1952 = vmatprep.subr.mxu0 0.0
    %1953 = vmatpush1.msra.mxu0 %v642
    %1954 = vmatprep.subr.mxu0 0.0
    %1955 = vmatpush1.msra.mxu0 %v641
    %1956 = vmatprep.subr.mxu0 0.0
    %1957 = vmatpush1.msra.mxu0 %v640
    %1958 = vmatprep.subr.mxu0 0.0
    %1959 = vmatpush1.msra.mxu0 %v639
    %1960 = vmatprep.subr.mxu0 0.0
    %1961 = vmatpush1.msra.mxu0 %v638
    %1962 = vmatprep.subr.mxu0 0.0
    %1963 = vmatpush1.msra.mxu0 %v637
    %1964 = vmatprep.subr.mxu0 0.0
    %1965 = vmatpush1.msra.mxu0 %v636
    %1966 = vmatprep.subr.mxu0 0.0
    %1967 = vmatpush1.msra.mxu0 %v635
    %1968 = vmatprep.subr.mxu0 0.0
    %1969 = vmatpush1.msra.mxu0 %v634
    %1970 = vmatprep.subr.mxu0 0.0
    %1971 = vmatpush1.msra.mxu0 %v633
    %1972 = vmatprep.subr.mxu0 0.0
    %1973 = vmatpush2.msra.mxu0 %v664
    %1974 = vmatprep.subr.mxu0 0.0
    %1975 = vmatpush2.msra.mxu0 %v663
    %1976 = vmatprep.subr.mxu0 0.0
    %1977 = vmatpush2.msra.mxu0 %v662
    %1978 = vmatprep.subr.mxu0 0.0
    %1979 = vmatpush2.msra.mxu0 %v661
    %1980 = vmatprep.subr.mxu0 0.0
    %1981 = vmatpush2.msra.mxu0 %v660
    %1982 = vmatprep.subr.mxu0 0.0
    %1983 = vmatpush2.msra.mxu0 %v659
    %1984 = vmatprep.subr.mxu0 0.0
    %1985 = vmatpush2.msra.mxu0 %v658
    %1986 = vmatprep.subr.mxu0 0.0
    %1987 = vmatpush2.msra.mxu0 %v657
    %1988 = vmatprep.subr.mxu0 0.0
    %1989 = vmatpush2.msra.mxu0 %v656
    %1990 = vmatprep.subr.mxu0 0.0
    %1991 = vmatpush2.msra.mxu0 %v655
    %1992 = vmatprep.subr.mxu0 0.0
    %1993 = vmatpush2.msra.mxu0 %v654
    %1994 = vmatprep.subr.mxu0 0.0
    %1995 = vmatpush2.msra.mxu0 %v653
    %1996 = vmatprep.subr.mxu0 0.0
    %1997 = vmatpush2.msra.mxu0 %v652
    %1998 = vmatprep.subr.mxu0 0.0
    %1999 = vmatpush2.msra.mxu0 %v651
    %2000 = vmatprep.subr.mxu0 0.0
    %2001 = vmatpush2.msra.mxu0 %v650
    %2002 = vmatprep.subr.mxu0 0.0
    %2003 = vmatpush2.msra.mxu0 %v649
    %2004 = vmatprep.mubr.f32.mxu0 %v56
    %2005 = vmatmul.mubr.f32.gmra.mxu0 %v55
    %v2006 = vpop.f32.mrf.mxu0
    %v2007 = vadd.f32 %v1922, %v2006
    %v2008 = vpop.f32.mrf.mxu0
    %2009 = vmatprep.mubr.f32.mxu0 %v88
    %2010 = vmatmul.mubr.f32.gmra.mxu0 %v87
    %v2011 = vpop.f32.mrf.mxu0
    %v2012 = vadd.f32 %v1927, %v2011
    %v2013 = vpop.f32.mrf.mxu0
    %2014 = vmatprep.mubr.f32.mxu0 %v120
    %2015 = vmatmul.mubr.f32.gmra.mxu0 %v119
    %v2016 = vpop.f32.mrf.mxu0
    %v2017 = vadd.f32 %v1932, %v2016
    %v2018 = vpop.f32.mrf.mxu0
    %2019 = vmatprep.mubr.f32.mxu0 %v152
    %2020 = vmatmul.mubr.f32.gmra.mxu0 %v151
    %v2021 = vpop.f32.mrf.mxu0
    %v2022 = vadd.f32 %v1937, %v2021
    %v2023 = vpop.f32.mrf.mxu0
    %2024 = vdwg.mxu0
    %2025 = vst [vmem:[%s2] sm:$0xff] %v2007
    %2026 = vst [vmem:[%s2 + $0x8] sm:$0xff] %v2012
    %2027 = vst [vmem:[%s2 + $0x10] sm:$0xff] %v2017
    %2028 = vst [vmem:[%s2 + $0x18] sm:$0xff] %v2022
    // Predicated region
    $region14: #{photonic_qcnn_forward.1} parent=1 // pred_check
      _
    $region15: #{photonic_qcnn_forward.1} parent=1 // pred_check_branch
      %2030 = sbr.rel (0) target = $region17
    $region16: #{photonic_qcnn_forward.1} parent=1 // pred_region
      _
    $region17: #{photonic_qcnn_forward.1} parent=1 // pred_fallthru
      _
    // Predicated region
    $region18: #{photonic_qcnn_forward.1} parent=1 // pred_check
      _
    $region19: #{photonic_qcnn_forward.1} parent=1 // pred_check_branch
      %2032 = sbr.rel (0) target = $region21
    $region20: #{photonic_qcnn_forward.1} parent=1 // pred_region
      _
    $region21: #{photonic_qcnn_forward.1} parent=1 // pred_fallthru
      _
    %2033 = vsyncpa [#allocation3], 1

</llo_original>
